<compile_context>
chip_gen: v7x
topology: tpu7x:2x2x1
jax: 0.10.0
libtpu: 0.0.40
codegen_flags: <defaults>
</compile_context>

<pallas_src>
import functools

import jax
import jax.numpy as jnp
from jax.experimental import pallas as pl
from jax.experimental.pallas import tpu as pltpu


def _round_up(n, m):
    return ((n + m - 1) // m) * m


def _cvae_kernel(
    latent_dim,
    # batch-tiled inputs
    x_ref, eps_ref, yb1_ref, yd1_ref,
    # resident weights / biases (constant index_map -> stay in VMEM across grid)
    w1x_ref, w2_ref, b2_ref, wmuv_ref, bmuv_ref,
    wd1z_ref, wd2_ref, bd2_ref, wd3_ref, bd3_ref,
    # outputs
    recon_ref, mulv_ref,
):
    f32 = jnp.float32
    bf16 = jnp.bfloat16

    # ---------------- encoder ----------------
    # cat([x, y]) @ W1 + b1 == x @ W1[:F] + (W1[F:][label] + b1); the second
    # term is the precomputed per-example bias yb1.
    h1 = jnp.dot(x_ref[...], w1x_ref[...], preferred_element_type=f32) + yb1_ref[...]
    h1 = jnp.maximum(h1, 0.0)

    h2 = jnp.dot(h1.astype(bf16), w2_ref[...], preferred_element_type=f32) + b2_ref[...]
    h2 = jnp.maximum(h2, 0.0)

    # Fused mu/log_var head; columns padded to a multiple of 128 lanes so the
    # matmul costs the same MXU passes but the store is lane-dense.
    head = jnp.dot(h2.astype(bf16), wmuv_ref[...], preferred_element_type=f32) + bmuv_ref[...]
    mulv_ref[...] = head.astype(mulv_ref.dtype)

    mu = head[:, :latent_dim]
    log_var = head[:, latent_dim:2 * latent_dim]

    # ---------------- reparameterize ----------------
    z = mu + eps_ref[...] * jnp.exp(0.5 * log_var)

    # ---------------- decoder ----------------
    # cat([z, y]) @ Wd1 + bd1 == z @ Wd1[:L] + yd1 (per-example bias).
    d1 = jnp.dot(z.astype(bf16), wd1z_ref[...], preferred_element_type=f32) + yd1_ref[...]
    d1 = jnp.maximum(d1, 0.0)

    d2 = jnp.dot(d1.astype(bf16), wd2_ref[...], preferred_element_type=f32) + bd2_ref[...]
    d2 = jnp.maximum(d2, 0.0)

    logits = jnp.dot(d2.astype(bf16), wd3_ref[...], preferred_element_type=f32) + bd3_ref[...]
    recon_ref[...] = jax.nn.sigmoid(logits).astype(recon_ref.dtype)


@functools.partial(jax.jit, static_argnames=("feature_dim", "latent_dim", "block_batch"))
def cvae_forward(x, y, eps, params, *, feature_dim, latent_dim, block_batch=256):
    """x: [B, feature_dim], y: [B, num_classes] one-hot (float), eps: [B, latent_dim]."""
    x = x.reshape(-1, feature_dim)            # matches x.view(-1, feature_dim)
    B = x.shape[0]
    f_pad = _round_up(feature_dim, 128)       # lane-dense recon width
    h_pad = _round_up(2 * latent_dim, 128)    # lane-dense fused-head width

    # Fold the one-hot concat matmuls into per-example biases (exact: one-hot
    # matmul is a row gather). Done once in the wrapper, in f32.
    yb1 = y.astype(jnp.float32) @ params["w1y"] + params["b1"]      # (B, 512)
    yd1 = y.astype(jnp.float32) @ params["wd1y"] + params["bd1"]    # (B, 256)

    # Batch tiling: 8-aligned tile, capped at block_batch; pad the batch.
    tb = min(block_batch, _round_up(B, 8))
    b_pad = _round_up(B, tb)
    pad = b_pad - B

    def padb(a):
        return jnp.pad(a, ((0, pad), (0, 0))) if pad else a

    x_p = padb(x.astype(jnp.bfloat16))
    eps_p = padb(eps.astype(jnp.float32))
    yb1_p = padb(yb1)
    yd1_p = padb(yd1)

    bmap = lambda i: (i, 0)   # batch-tiled arrays
    wmap = lambda i: (0, 0)   # resident weights / biases

    in_specs = [
        pl.BlockSpec((tb, feature_dim), bmap),     # x (bf16)
        pl.BlockSpec((tb, latent_dim), bmap),      # eps (f32)
        pl.BlockSpec((tb, 512), bmap),             # per-example encoder bias
        pl.BlockSpec((tb, 256), bmap),             # per-example decoder bias
        pl.BlockSpec((feature_dim, 512), wmap),    # w1x
        pl.BlockSpec((512, 256), wmap),            # w2
        pl.BlockSpec((1, 256), wmap),              # b2
        pl.BlockSpec((256, h_pad), wmap),          # fused+padded [wmu | wlv]
        pl.BlockSpec((1, h_pad), wmap),            # fused+padded [bmu | blv]
        pl.BlockSpec((latent_dim, 256), wmap),     # wd1z
        pl.BlockSpec((256, 512), wmap),            # wd2
        pl.BlockSpec((1, 512), wmap),              # bd2
        pl.BlockSpec((512, f_pad), wmap),          # wd3 (padded cols)
        pl.BlockSpec((1, f_pad), wmap),            # bd3 (padded cols)
    ]
    out_specs = (
        pl.BlockSpec((tb, f_pad), bmap),
        pl.BlockSpec((tb, h_pad), bmap),
    )
    out_shapes = (
        jax.ShapeDtypeStruct((b_pad, f_pad), jnp.float32),   # padded reconstruction
        jax.ShapeDtypeStruct((b_pad, h_pad), jnp.float32),   # padded [mu | log_var]
    )

    recon_pad, mulv_pad = pl.pallas_call(
        functools.partial(_cvae_kernel, latent_dim),
        grid=(b_pad // tb,),
        in_specs=in_specs,
        out_specs=out_specs,
        out_shape=out_shapes,
        compiler_params=pltpu.CompilerParams(dimension_semantics=("parallel",)),
    )(
        x_p, eps_p, yb1_p, yd1_p,
        params["w1x"], params["w2"], params["b2"],
        params["wmuv"], params["bmuv"],
        params["wd1z"], params["wd2"], params["bd2"],
        params["wd3p"], params["bd3p"],
    )

    recon = recon_pad[:B, :feature_dim]
    mu = mulv_pad[:B, :latent_dim]
    log_var = mulv_pad[:B, latent_dim:2 * latent_dim]
    return recon, mu, log_var


def init_params(key, feature_dim, latent_dim, num_classes):
    """Reference (f32) params, nn.Linear-style init. Weights as [in, out], biases [1, out]."""
    def linear(k, fan_in, fan_out):
        kw, kb = jax.random.split(k)
        bound = 1.0 / jnp.sqrt(fan_in)
        w = jax.random.uniform(kw, (fan_in, fan_out), jnp.float32, -bound, bound)
        b = jax.random.uniform(kb, (1, fan_out), jnp.float32, -bound, bound)
        return w, b

    keys = jax.random.split(key, 7)
    w1, b1 = linear(keys[0], feature_dim + num_classes, 512)
    w2, b2 = linear(keys[1], 512, 256)
    wmu, bmu = linear(keys[2], 256, latent_dim)
    wlv, blv = linear(keys[3], 256, latent_dim)
    wd1, bd1 = linear(keys[4], latent_dim + num_classes, 256)
    wd2, bd2 = linear(keys[5], 256, 512)
    wd3, bd3 = linear(keys[6], 512, feature_dim)

    return {
        "w1x": w1[:feature_dim], "w1y": w1[feature_dim:], "b1": b1,
        "w2": w2, "b2": b2,
        "wmu": wmu, "bmu": bmu,
        "wlv": wlv, "blv": blv,
        "wd1z": wd1[:latent_dim], "wd1y": wd1[latent_dim:], "bd1": bd1,
        "wd2": wd2, "bd2": bd2,
        "wd3": wd3, "bd3": bd3,
    }


def pack_params(p, feature_dim, latent_dim):
    """Kernel-ready params: bf16 matmul weights, fused+padded heads, padded wd3."""
    bf16 = jnp.bfloat16
    f_pad = _round_up(feature_dim, 128)
    h_pad = _round_up(2 * latent_dim, 128)

    wmuv = jnp.concatenate([p["wmu"], p["wlv"]], axis=1)   # (256, 2L)
    bmuv = jnp.concatenate([p["bmu"], p["blv"]], axis=1)   # (1, 2L)
    wmuv = jnp.pad(wmuv, ((0, 0), (0, h_pad - 2 * latent_dim)))
    bmuv = jnp.pad(bmuv, ((0, 0), (0, h_pad - 2 * latent_dim)))
    wd3p = jnp.pad(p["wd3"], ((0, 0), (0, f_pad - feature_dim)))
    bd3p = jnp.pad(p["bd3"], ((0, 0), (0, f_pad - feature_dim)))

    return {
        # used by the wrapper (f32) to build per-example first-layer biases
        "w1y": p["w1y"], "b1": p["b1"], "wd1y": p["wd1y"], "bd1": p["bd1"],
        # kernel weights (bf16) and biases (f32)
        "w1x": p["w1x"].astype(bf16),
        "w2": p["w2"].astype(bf16), "b2": p["b2"],
        "wmuv": wmuv.astype(bf16), "bmuv": bmuv,
        "wd1z": p["wd1z"].astype(bf16),
        "wd2": p["wd2"].astype(bf16), "bd2": p["bd2"],
        "wd3p": wd3p.astype(bf16), "bd3p": bd3p,
    }


if __name__ == "__main__":
    feature_dim = 64
    latent_dim = 16
    num_classes = 8
    batch = 8

    key = jax.random.PRNGKey(0)
    k_x, k_y, k_eps, k_params = jax.random.split(key, 4)

    x = jax.random.normal(k_x, (batch, feature_dim), jnp.float32)
    labels = jax.random.randint(k_y, (batch,), 0, num_classes)
    y = jax.nn.one_hot(labels, num_classes, dtype=jnp.float32)
    eps = jax.random.normal(k_eps, (batch, latent_dim), jnp.float32)

    ref_params = init_params(k_params, feature_dim, latent_dim, num_classes)
    params = pack_params(ref_params, feature_dim, latent_dim)

    recon, mu, log_var = cvae_forward(
        x, y, eps, params, feature_dim=feature_dim, latent_dim=latent_dim
    )
    jax.block_until_ready((recon, mu, log_var))

    # Pure-JAX reference with matching bf16-matmul / f32-accumulate precision.
    def ref(x, y, eps, p):
        bf16, f32 = jnp.bfloat16, jnp.float32

        def mm(a, w):
            return jnp.dot(a.astype(bf16), w.astype(bf16), preferred_element_type=f32)

        h = jax.nn.relu(mm(x, p["w1x"]) + (y @ p["w1y"] + p["b1"]))
        h = jax.nn.relu(mm(h, p["w2"]) + p["b2"])
        mu_ = mm(h, p["wmu"]) + p["bmu"]
        lv_ = mm(h, p["wlv"]) + p["blv"]
        z = mu_ + eps * jnp.exp(0.5 * lv_)
        d = jax.nn.relu(mm(z, p["wd1z"]) + (y @ p["wd1y"] + p["bd1"]))
        d = jax.nn.relu(mm(d, p["wd2"]) + p["bd2"])
        return jax.nn.sigmoid(mm(d, p["wd3"]) + p["bd3"]), mu_, lv_

    r_ref, mu_r, lv_r = ref(x, y, eps, ref_params)
    assert jnp.allclose(recon, r_ref, atol=1e-2), "recon mismatch"
    assert jnp.allclose(mu, mu_r, atol=1e-2), "mu mismatch"
    assert jnp.allclose(log_var, lv_r, atol=1e-2), "log_var mismatch"

    print("KERNEL_OK")
</pallas_src>

<mosaic_0001>
module attributes {stable_mosaic.version = 11 : i64} {
  func.func @_cvae_kernel(%arg0: i32, %arg1: memref<8x64xbf16, #tpu.memory_space<vmem>>, %arg2: memref<8x16xf32, #tpu.memory_space<vmem>>, %arg3: memref<8x512xf32, #tpu.memory_space<vmem>>, %arg4: memref<8x256xf32, #tpu.memory_space<vmem>>, %arg5: memref<64x512xbf16, #tpu.memory_space<vmem>>, %arg6: memref<512x256xbf16, #tpu.memory_space<vmem>>, %arg7: memref<1x256xf32, #tpu.memory_space<vmem>>, %arg8: memref<256x128xbf16, #tpu.memory_space<vmem>>, %arg9: memref<1x128xf32, #tpu.memory_space<vmem>>, %arg10: memref<16x256xbf16, #tpu.memory_space<vmem>>, %arg11: memref<256x512xbf16, #tpu.memory_space<vmem>>, %arg12: memref<1x512xf32, #tpu.memory_space<vmem>>, %arg13: memref<512x128xbf16, #tpu.memory_space<vmem>>, %arg14: memref<1x128xf32, #tpu.memory_space<vmem>>, %arg15: memref<8x128xf32, #tpu.memory_space<vmem>>, %arg16: memref<8x128xf32, #tpu.memory_space<vmem>>) attributes {dimension_semantics = [#tpu.dimension_semantics<parallel>], iteration_bounds = array<i64: 1>, scalar_prefetch = 0 : i64, scratch_operands = 0 : i64, tpu.core_type = #tpu.core_type<tc>, window_params = [{transform_indices = @transform_0, window_bounds = array<i64: 8, 64>}, {transform_indices = @transform_1, window_bounds = array<i64: 8, 16>}, {transform_indices = @transform_2, window_bounds = array<i64: 8, 512>}, {transform_indices = @transform_3, window_bounds = array<i64: 8, 256>}, {pipeline_mode = #tpu.pipeline_mode<synchronous>, transform_indices = @transform_4, window_bounds = array<i64: 64, 512>}, {pipeline_mode = #tpu.pipeline_mode<synchronous>, transform_indices = @transform_5, window_bounds = array<i64: 512, 256>}, {pipeline_mode = #tpu.pipeline_mode<synchronous>, transform_indices = @transform_6, window_bounds = array<i64: 1, 256>}, {pipeline_mode = #tpu.pipeline_mode<synchronous>, transform_indices = @transform_7, window_bounds = array<i64: 256, 128>}, {pipeline_mode = #tpu.pipeline_mode<synchronous>, transform_indices = @transform_8, window_bounds = array<i64: 1, 128>}, {pipeline_mode = #tpu.pipeline_mode<synchronous>, transform_indices = @transform_9, window_bounds = array<i64: 16, 256>}, {pipeline_mode = #tpu.pipeline_mode<synchronous>, transform_indices = @transform_10, window_bounds = array<i64: 256, 512>}, {pipeline_mode = #tpu.pipeline_mode<synchronous>, transform_indices = @transform_11, window_bounds = array<i64: 1, 512>}, {pipeline_mode = #tpu.pipeline_mode<synchronous>, transform_indices = @transform_12, window_bounds = array<i64: 512, 128>}, {pipeline_mode = #tpu.pipeline_mode<synchronous>, transform_indices = @transform_13, window_bounds = array<i64: 1, 128>}, {transform_indices = @transform_14, window_bounds = array<i64: 8, 128>}, {transform_indices = @transform_15, window_bounds = array<i64: 8, 128>}]} {
    %c0 = arith.constant 0 : index
    %c0_0 = arith.constant 0 : index
    %0 = vector.load %arg1[%c0, %c0_0] : memref<8x64xbf16, #tpu.memory_space<vmem>>, vector<8x64xbf16>
    %c0_1 = arith.constant 0 : index
    %c0_2 = arith.constant 0 : index
    %1 = vector.load %arg5[%c0_1, %c0_2] : memref<64x512xbf16, #tpu.memory_space<vmem>>, vector<64x512xbf16>
    %cst = arith.constant dense<0.000000e+00> : vector<8x512xf32>
    %2 = tpu.matmul %0, %1, %cst {dimension_numbers = #tpu.dot_dimension_numbers<[1], [0], [0], [1], [0, 0, 1, 1], [], []>} : vector<8x64xbf16>, vector<64x512xbf16>, vector<8x512xf32> -> vector<8x512xf32>
    %c0_3 = arith.constant 0 : index
    %c0_4 = arith.constant 0 : index
    %3 = vector.load %arg3[%c0_3, %c0_4] : memref<8x512xf32, #tpu.memory_space<vmem>>, vector<8x512xf32>
    %4 = arith.addf %2, %3 : vector<8x512xf32>
    %cst_5 = arith.constant 0.000000e+00 : f32
    %5 = vector.broadcast %cst_5 : f32 to vector<8x512xf32>
    %6 = arith.maximumf %4, %5 : vector<8x512xf32>
    %7 = arith.truncf %6 : vector<8x512xf32> to vector<8x512xbf16>
    %c0_6 = arith.constant 0 : index
    %c0_7 = arith.constant 0 : index
    %8 = vector.load %arg6[%c0_6, %c0_7] : memref<512x256xbf16, #tpu.memory_space<vmem>>, vector<512x256xbf16>
    %cst_8 = arith.constant dense<0.000000e+00> : vector<8x256xf32>
    %9 = tpu.matmul %7, %8, %cst_8 {dimension_numbers = #tpu.dot_dimension_numbers<[1], [0], [0], [1], [0, 0, 1, 1], [], []>} : vector<8x512xbf16>, vector<512x256xbf16>, vector<8x256xf32> -> vector<8x256xf32>
    %c0_9 = arith.constant 0 : index
    %c0_10 = arith.constant 0 : index
    %10 = vector.load %arg7[%c0_9, %c0_10] : memref<1x256xf32, #tpu.memory_space<vmem>>, vector<1x256xf32>
    %11 = vector.broadcast %10 : vector<1x256xf32> to vector<8x256xf32>
    %12 = arith.addf %9, %11 : vector<8x256xf32>
    %cst_11 = arith.constant 0.000000e+00 : f32
    %13 = vector.broadcast %cst_11 : f32 to vector<8x256xf32>
    %14 = arith.maximumf %12, %13 : vector<8x256xf32>
    %15 = arith.truncf %14 : vector<8x256xf32> to vector<8x256xbf16>
    %c0_12 = arith.constant 0 : index
    %c0_13 = arith.constant 0 : index
    %16 = vector.load %arg8[%c0_12, %c0_13] : memref<256x128xbf16, #tpu.memory_space<vmem>>, vector<256x128xbf16>
    %cst_14 = arith.constant dense<0.000000e+00> : vector<8x128xf32>
    %17 = tpu.matmul %15, %16, %cst_14 {dimension_numbers = #tpu.dot_dimension_numbers<[1], [0], [0], [1], [0, 0, 1, 1], [], []>} : vector<8x256xbf16>, vector<256x128xbf16>, vector<8x128xf32> -> vector<8x128xf32>
    %c0_15 = arith.constant 0 : index
    %c0_16 = arith.constant 0 : index
    %18 = vector.load %arg9[%c0_15, %c0_16] : memref<1x128xf32, #tpu.memory_space<vmem>>, vector<1x128xf32>
    %19 = vector.broadcast %18 : vector<1x128xf32> to vector<8x128xf32>
    %20 = arith.addf %17, %19 : vector<8x128xf32>
    %c0_17 = arith.constant 0 : index
    %c0_18 = arith.constant 0 : index
    %21 = vector.load %arg16[%c0_17, %c0_18] : memref<8x128xf32, #tpu.memory_space<vmem>>, vector<8x128xf32>
    tpu.vector_store %arg16[%c0_17, %c0_18], %20 {strides = array<i32>} : memref<8x128xf32, #tpu.memory_space<vmem>>, vector<8x128xf32>,
    %22 = vector.extract_strided_slice %20 {offsets = [0, 0], sizes = [8, 16], strides = [1, 1]} : vector<8x128xf32> to vector<8x16xf32>
    %23 = vector.extract_strided_slice %20 {offsets = [0, 16], sizes = [8, 16], strides = [1, 1]} : vector<8x128xf32> to vector<8x16xf32>
    %c0_19 = arith.constant 0 : index
    %c0_20 = arith.constant 0 : index
    %24 = vector.load %arg2[%c0_19, %c0_20] : memref<8x16xf32, #tpu.memory_space<vmem>>, vector<8x16xf32>
    %cst_21 = arith.constant 5.000000e-01 : f32
    %25 = vector.broadcast %cst_21 : f32 to vector<8x16xf32>
    %26 = arith.mulf %25, %23 : vector<8x16xf32>
    %27 = math.exp %26 : vector<8x16xf32>
    %28 = arith.mulf %24, %27 : vector<8x16xf32>
    %29 = arith.addf %22, %28 : vector<8x16xf32>
    %30 = arith.truncf %29 : vector<8x16xf32> to vector<8x16xbf16>
    %c0_22 = arith.constant 0 : index
    %c0_23 = arith.constant 0 : index
    %31 = vector.load %arg10[%c0_22, %c0_23] : memref<16x256xbf16, #tpu.memory_space<vmem>>, vector<16x256xbf16>
    %cst_24 = arith.constant dense<0.000000e+00> : vector<8x256xf32>
    %32 = tpu.matmul %30, %31, %cst_24 {dimension_numbers = #tpu.dot_dimension_numbers<[1], [0], [0], [1], [0, 0, 1, 1], [], []>} : vector<8x16xbf16>, vector<16x256xbf16>, vector<8x256xf32> -> vector<8x256xf32>
    %c0_25 = arith.constant 0 : index
    %c0_26 = arith.constant 0 : index
    %33 = vector.load %arg4[%c0_25, %c0_26] : memref<8x256xf32, #tpu.memory_space<vmem>>, vector<8x256xf32>
    %34 = arith.addf %32, %33 : vector<8x256xf32>
    %cst_27 = arith.constant 0.000000e+00 : f32
    %35 = vector.broadcast %cst_27 : f32 to vector<8x256xf32>
    %36 = arith.maximumf %34, %35 : vector<8x256xf32>
    %37 = arith.truncf %36 : vector<8x256xf32> to vector<8x256xbf16>
    %c0_28 = arith.constant 0 : index
    %c0_29 = arith.constant 0 : index
    %38 = vector.load %arg11[%c0_28, %c0_29] : memref<256x512xbf16, #tpu.memory_space<vmem>>, vector<256x512xbf16>
    %cst_30 = arith.constant dense<0.000000e+00> : vector<8x512xf32>
    %39 = tpu.matmul %37, %38, %cst_30 {dimension_numbers = #tpu.dot_dimension_numbers<[1], [0], [0], [1], [0, 0, 1, 1], [], []>} : vector<8x256xbf16>, vector<256x512xbf16>, vector<8x512xf32> -> vector<8x512xf32>
    %c0_31 = arith.constant 0 : index
    %c0_32 = arith.constant 0 : index
    %40 = vector.load %arg12[%c0_31, %c0_32] : memref<1x512xf32, #tpu.memory_space<vmem>>, vector<1x512xf32>
    %41 = vector.broadcast %40 : vector<1x512xf32> to vector<8x512xf32>
    %42 = arith.addf %39, %41 : vector<8x512xf32>
    %cst_33 = arith.constant 0.000000e+00 : f32
    %43 = vector.broadcast %cst_33 : f32 to vector<8x512xf32>
    %44 = arith.maximumf %42, %43 : vector<8x512xf32>
    %45 = arith.truncf %44 : vector<8x512xf32> to vector<8x512xbf16>
    %c0_34 = arith.constant 0 : index
    %c0_35 = arith.constant 0 : index
    %46 = vector.load %arg13[%c0_34, %c0_35] : memref<512x128xbf16, #tpu.memory_space<vmem>>, vector<512x128xbf16>
    %cst_36 = arith.constant dense<0.000000e+00> : vector<8x128xf32>
    %47 = tpu.matmul %45, %46, %cst_36 {dimension_numbers = #tpu.dot_dimension_numbers<[1], [0], [0], [1], [0, 0, 1, 1], [], []>} : vector<8x512xbf16>, vector<512x128xbf16>, vector<8x128xf32> -> vector<8x128xf32>
    %c0_37 = arith.constant 0 : index
    %c0_38 = arith.constant 0 : index
    %48 = vector.load %arg14[%c0_37, %c0_38] : memref<1x128xf32, #tpu.memory_space<vmem>>, vector<1x128xf32>
    %49 = vector.broadcast %48 : vector<1x128xf32> to vector<8x128xf32>
    %50 = arith.addf %47, %49 : vector<8x128xf32>
    %51 = arith.negf %50 : vector<8x128xf32>
    %52 = math.exp %51 : vector<8x128xf32>
    %cst_39 = arith.constant 1.000000e+00 : f32
    %53 = vector.broadcast %cst_39 : f32 to vector<8x128xf32>
    %54 = arith.addf %53, %52 : vector<8x128xf32>
    %55 = arith.divf %53, %54 : vector<8x128xf32>
    %c0_40 = arith.constant 0 : index
    %c0_41 = arith.constant 0 : index
    %56 = vector.load %arg15[%c0_40, %c0_41] : memref<8x128xf32, #tpu.memory_space<vmem>>, vector<8x128xf32>
    tpu.vector_store %arg15[%c0_40, %c0_41], %55 {strides = array<i32>} : memref<8x128xf32, #tpu.memory_space<vmem>>, vector<8x128xf32>,
    return
  }
  func.func @transform_0(%arg0: i32) -> (i32, i32) {
    %c0_i32 = arith.constant 0 : i32
    %c0_i32_0 = arith.constant 0 : i32
    return %arg0, %c0_i32 : i32, i32
  }
  func.func @transform_1(%arg0: i32) -> (i32, i32) {
    %c0_i32 = arith.constant 0 : i32
    %c0_i32_0 = arith.constant 0 : i32
    return %arg0, %c0_i32 : i32, i32
  }
  func.func @transform_2(%arg0: i32) -> (i32, i32) {
    %c0_i32 = arith.constant 0 : i32
    %c0_i32_0 = arith.constant 0 : i32
    return %arg0, %c0_i32 : i32, i32
  }
  func.func @transform_3(%arg0: i32) -> (i32, i32) {
    %c0_i32 = arith.constant 0 : i32
    %c0_i32_0 = arith.constant 0 : i32
    return %arg0, %c0_i32 : i32, i32
  }
  func.func @transform_4(%arg0: i32) -> (i32, i32) {
    %c0_i32 = arith.constant 0 : i32
    %c0_i32_0 = arith.constant 0 : i32
    %c0_i32_1 = arith.constant 0 : i32
    return %c0_i32, %c0_i32_0 : i32, i32
  }
  func.func @transform_5(%arg0: i32) -> (i32, i32) {
    %c0_i32 = arith.constant 0 : i32
    %c0_i32_0 = arith.constant 0 : i32
    %c0_i32_1 = arith.constant 0 : i32
    return %c0_i32, %c0_i32_0 : i32, i32
  }
  func.func @transform_6(%arg0: i32) -> (i32, i32) {
    %c0_i32 = arith.constant 0 : i32
    %c0_i32_0 = arith.constant 0 : i32
    %c0_i32_1 = arith.constant 0 : i32
    return %c0_i32, %c0_i32_0 : i32, i32
  }
  func.func @transform_7(%arg0: i32) -> (i32, i32) {
    %c0_i32 = arith.constant 0 : i32
    %c0_i32_0 = arith.constant 0 : i32
    %c0_i32_1 = arith.constant 0 : i32
    return %c0_i32, %c0_i32_0 : i32, i32
  }
  func.func @transform_8(%arg0: i32) -> (i32, i32) {
    %c0_i32 = arith.constant 0 : i32
    %c0_i32_0 = arith.constant 0 : i32
    %c0_i32_1 = arith.constant 0 : i32
    return %c0_i32, %c0_i32_0 : i32, i32
  }
  func.func @transform_9(%arg0: i32) -> (i32, i32) {
    %c0_i32 = arith.constant 0 : i32
    %c0_i32_0 = arith.constant 0 : i32
    %c0_i32_1 = arith.constant 0 : i32
    return %c0_i32, %c0_i32_0 : i32, i32
  }
  func.func @transform_10(%arg0: i32) -> (i32, i32) {
    %c0_i32 = arith.constant 0 : i32
    %c0_i32_0 = arith.constant 0 : i32
    %c0_i32_1 = arith.constant 0 : i32
    return %c0_i32, %c0_i32_0 : i32, i32
  }
  func.func @transform_11(%arg0: i32) -> (i32, i32) {
    %c0_i32 = arith.constant 0 : i32
    %c0_i32_0 = arith.constant 0 : i32
    %c0_i32_1 = arith.constant 0 : i32
    return %c0_i32, %c0_i32_0 : i32, i32
  }
  func.func @transform_12(%arg0: i32) -> (i32, i32) {
    %c0_i32 = arith.constant 0 : i32
    %c0_i32_0 = arith.constant 0 : i32
    %c0_i32_1 = arith.constant 0 : i32
    return %c0_i32, %c0_i32_0 : i32, i32
  }
  func.func @transform_13(%arg0: i32) -> (i32, i32) {
    %c0_i32 = arith.constant 0 : i32
    %c0_i32_0 = arith.constant 0 : i32
    %c0_i32_1 = arith.constant 0 : i32
    return %c0_i32, %c0_i32_0 : i32, i32
  }
  func.func @transform_14(%arg0: i32) -> (i32, i32) {
    %c0_i32 = arith.constant 0 : i32
    %c0_i32_0 = arith.constant 0 : i32
    return %arg0, %c0_i32 : i32, i32
  }
  func.func @transform_15(%arg0: i32) -> (i32, i32) {
    %c0_i32 = arith.constant 0 : i32
    %c0_i32_0 = arith.constant 0 : i32
    return %arg0, %c0_i32 : i32, i32
  }
}

</mosaic_0001>

<llo_original>
// kernel: cvae_forward.1
$region0: #{cvae_forward.1}
  #allocation0 [shape = 'u32[]', space=smem, size = 0x4, offset = 0x4, fixed_abs, tag = 'smem constant byte address 0x4 - core index']
  #allocation1 [shape = 'u32[144,128]{1,0:T(1,128)}', space=vmem, size = 0x12000, scoped, tag = 'internal scratch']
  %s0 = inlined_call_operand.vmem [shape: bf16[8,64], index: 0, kind: input, shape index: {}]
  %s1 = inlined_call_operand.hbm [shape: f32[8,16], index: 1, kind: input, shape index: {}]
  %s2 = inlined_call_operand.vmem [shape: f32[8,512], index: 2, kind: input, shape index: {}]
  %s3 = inlined_call_operand.vmem [shape: f32[8,256], index: 3, kind: input, shape index: {}]
  %s4 = inlined_call_operand.vmem [shape: bf16[64,512], index: 4, kind: input, shape index: {}]
  %s5 = inlined_call_operand.hbm [shape: bf16[512,256], index: 5, kind: input, shape index: {}]
  %s6 = inlined_call_operand.vmem [shape: f32[1,256], index: 6, kind: input, shape index: {}]
  %s7 = inlined_call_operand.hbm [shape: bf16[256,128], index: 7, kind: input, shape index: {}]
  %s8 = inlined_call_operand.vmem [shape: f32[1,128], index: 8, kind: input, shape index: {}]
  %s9 = inlined_call_operand.vmem [shape: bf16[16,256], index: 9, kind: input, shape index: {}]
  %s10 = inlined_call_operand.hbm [shape: bf16[256,512], index: 10, kind: input, shape index: {}]
  %s11 = inlined_call_operand.hbm [shape: f32[1,512], index: 11, kind: input, shape index: {}]
  %s12 = inlined_call_operand.hbm [shape: bf16[512,128], index: 12, kind: input, shape index: {}]
  %s13 = inlined_call_operand.hbm [shape: f32[1,128], index: 13, kind: input, shape index: {}]
  %s14 = inlined_call_operand.hbm [shape: f32[8,128], index: 14, kind: output, shape index: {0}]
  %s15 = inlined_call_operand.vmem [shape: f32[8,128], index: 15, kind: output, shape index: {1}]
  %16 = xla_tuple %s14, %s15
  %s17 = sld [smem:[#allocation0]]
  $region102: #{cvae_forward.1} parent=0
    _
  %s19 = ssub.s32 1, %s17
  %s20 = scalar_select 0, %s19, %s17
  $region1: #{cvae_forward.1} parent=0
    #allocation2 [shape = 'u8[4096]{0}', space=vmem, size = 0x1000, scoped, tag = 'input window, operand 1, single buffered']
    #allocation3 [shape = 's32[1]{0}', space=sflag, size = 0x4, scoped, tag = 'scoped memory for cvae_forward.1']
    #allocation4 [shape = 's32[1]{0}', space=sflag, size = 0x4, scoped, tag = 'scoped memory for cvae_forward.1']
    #allocation5 [shape = 'u8[262144]{0}', space=vmem, size = 0x40000, scoped, tag = 'input window, operand 5, single buffered']
    #allocation6 [shape = 's32[1]{0}', space=sflag, size = 0x4, scoped, tag = 'scoped memory for cvae_forward.1']
    #allocation7 [shape = 'u8[65536]{0}', space=vmem, size = 0x10000, scoped, tag = 'input window, operand 7, single buffered']
    #allocation8 [shape = 'u8[262144]{0}', space=vmem, size = 0x40000, scoped, tag = 'input window, operand 10, single buffered']
    #allocation9 [shape = 's32[1]{0}', space=sflag, size = 0x4, scoped, tag = 'scoped memory for cvae_forward.1']
    #allocation10 [shape = 'u8[2048]{0}', space=vmem, size = 0x800, scoped, tag = 'input window, operand 11, single buffered']
    #allocation11 [shape = 'u8[131072]{0}', space=vmem, size = 0x20000, scoped, tag = 'input window, operand 12, single buffered']
    #allocation12 [shape = 's32[1]{0}', space=sflag, size = 0x4, scoped, tag = 'scoped memory for cvae_forward.1']
    #allocation13 [shape = 'u8[512]{0}', space=vmem, size = 0x400, scoped, tag = 'input window, operand 13, single buffered']
    #allocation14 [shape = 'u8[4096]{0}', space=vmem, size = 0x1000, scoped, tag = 'output window, operand 0, single buffered']
    %21 = vsyncpa [#allocation3], 0
    %22 = vsyncpa [#allocation6], 0
    %23 = vsyncpa [#allocation9], 0
    %24 = vsyncpa [#allocation12], 0
    %25 = vsyncpa [#allocation4], 0
    // Predicated region
    $region2: #{cvae_forward.1} parent=1 // pred_check
      _
    $region3: #{cvae_forward.1} parent=1 // pred_check_branch
      %27 = sbr.rel (0) target = $region5
    $region4: #{cvae_forward.1} parent=1 // pred_region
      _
    $region5: #{cvae_forward.1} parent=1 // pred_fallthru
      _
    // Predicated region
    $region6: #{cvae_forward.1} parent=1 // pred_check
      _
    $region7: #{cvae_forward.1} parent=1 // pred_check_branch
      %29 = sbr.rel (0) target = $region9
    $region8: #{cvae_forward.1} parent=1 // pred_region
      %s31 = ssub.s32 128, 128
      %32 = vsyncadd [#allocation3], %s31
      %s34 = sshll.u32 [#allocation2], 4
      %s35 = int_to_ptr.vmem [resolvable:$true] %s34
      %37 = dma.hbm_to_vmem [thread:$0]  %s1, 128, %s35, [#allocation3]
    $region9: #{cvae_forward.1} parent=1 // pred_fallthru
      _
    // Predicated region
    $region10: #{cvae_forward.1} parent=1 // pred_check
      _
    $region11: #{cvae_forward.1} parent=1 // pred_check_branch
      %39 = sbr.rel (0) target = $region13
    $region12: #{cvae_forward.1} parent=1 // pred_region
      _
    $region13: #{cvae_forward.1} parent=1 // pred_fallthru
      _
    // Predicated region
    $region14: #{cvae_forward.1} parent=1 // pred_check
      _
    $region15: #{cvae_forward.1} parent=1 // pred_check_branch
      %41 = sbr.rel (0) target = $region17
    $region16: #{cvae_forward.1} parent=1 // pred_region
      _
    $region17: #{cvae_forward.1} parent=1 // pred_fallthru
      _
    // Predicated region
    $region18: #{cvae_forward.1} parent=1 // pred_check
      _
    $region19: #{cvae_forward.1} parent=1 // pred_check_branch
      %43 = sbr.rel (0) target = $region21
    $region20: #{cvae_forward.1} parent=1 // pred_region
      _
    $region21: #{cvae_forward.1} parent=1 // pred_fallthru
      _
    // Predicated region
    $region22: #{cvae_forward.1} parent=1 // pred_check
      _
    $region23: #{cvae_forward.1} parent=1 // pred_check_branch
      %45 = sbr.rel (0) target = $region25
    $region24: #{cvae_forward.1} parent=1 // pred_region
      %s47 = ssub.s32 8192, 8192
      %48 = vsyncadd [#allocation6], %s47
      %s49 = sshll.u32 [#allocation5], 4
      %s50 = int_to_ptr.vmem [resolvable:$true] %s49
      %55 = dma.hbm_to_vmem [thread:$0]  %s5, 8192, %s50, [#allocation6], 128, 128, 8
    $region25: #{cvae_forward.1} parent=1 // pred_fallthru
      _
    // Predicated region
    $region26: #{cvae_forward.1} parent=1 // pred_check
      _
    $region27: #{cvae_forward.1} parent=1 // pred_check_branch
      %57 = sbr.rel (0) target = $region29
    $region28: #{cvae_forward.1} parent=1 // pred_region
      _
    $region29: #{cvae_forward.1} parent=1 // pred_fallthru
      _
    // Predicated region
    $region30: #{cvae_forward.1} parent=1 // pred_check
      _
    $region31: #{cvae_forward.1} parent=1 // pred_check_branch
      %59 = sbr.rel (0) target = $region33
    $region32: #{cvae_forward.1} parent=1 // pred_region
      %s61 = ssub.s32 2048, 2048
      %62 = vsyncadd [#allocation6], %s61
      %s63 = sshll.u32 [#allocation7], 4
      %s64 = int_to_ptr.vmem [resolvable:$true] %s63
      %69 = dma.hbm_to_vmem [thread:$0]  %s7, 2048, %s64, [#allocation6], 64, 64, 4
    $region33: #{cvae_forward.1} parent=1 // pred_fallthru
      _
    // Predicated region
    $region34: #{cvae_forward.1} parent=1 // pred_check
      _
    $region35: #{cvae_forward.1} parent=1 // pred_check_branch
      %71 = sbr.rel (0) target = $region37
    $region36: #{cvae_forward.1} parent=1 // pred_region
      _
    $region37: #{cvae_forward.1} parent=1 // pred_fallthru
      _
    // Predicated region
    $region38: #{cvae_forward.1} parent=1 // pred_check
      _
    $region39: #{cvae_forward.1} parent=1 // pred_check_branch
      %73 = sbr.rel (0) target = $region41
    $region40: #{cvae_forward.1} parent=1 // pred_region
      _
    $region41: #{cvae_forward.1} parent=1 // pred_fallthru
      _
    // Predicated region
    $region42: #{cvae_forward.1} parent=1 // pred_check
      _
    $region43: #{cvae_forward.1} parent=1 // pred_check_branch
      %75 = sbr.rel (0) target = $region45
    $region44: #{cvae_forward.1} parent=1 // pred_region
      %s77 = ssub.s32 8192, 8192
      %78 = vsyncadd [#allocation9], %s77
      %s79 = sshll.u32 [#allocation8], 4
      %s80 = int_to_ptr.vmem [resolvable:$true] %s79
      %85 = dma.hbm_to_vmem [thread:$0]  %s10, 8192, %s80, [#allocation9], 256, 256, 16
    $region45: #{cvae_forward.1} parent=1 // pred_fallthru
      _
    // Predicated region
    $region46: #{cvae_forward.1} parent=1 // pred_check
      _
    $region47: #{cvae_forward.1} parent=1 // pred_check_branch
      %87 = sbr.rel (0) target = $region49
    $region48: #{cvae_forward.1} parent=1 // pred_region
      %s89 = ssub.s32 64, 64
      %90 = vsyncadd [#allocation9], %s89
      %s92 = sshll.u32 [#allocation10], 4
      %s93 = int_to_ptr.vmem [resolvable:$true] %s92
      %95 = dma.hbm_to_vmem [thread:$0]  %s11, 64, %s93, [#allocation9]
    $region49: #{cvae_forward.1} parent=1 // pred_fallthru
      _
    // Predicated region
    $region50: #{cvae_forward.1} parent=1 // pred_check
      _
    $region51: #{cvae_forward.1} parent=1 // pred_check_branch
      %97 = sbr.rel (0) target = $region53
    $region52: #{cvae_forward.1} parent=1 // pred_region
      %s99 = ssub.s32 4096, 4096
      %100 = vsyncadd [#allocation12], %s99
      %s101 = sshll.u32 [#allocation11], 4
      %s102 = int_to_ptr.vmem [resolvable:$true] %s101
      %107 = dma.hbm_to_vmem [thread:$0]  %s12, 4096, %s102, [#allocation12], 64, 64, 4
    $region53: #{cvae_forward.1} parent=1 // pred_fallthru
      _
    // Predicated region
    $region54: #{cvae_forward.1} parent=1 // pred_check
      _
    $region55: #{cvae_forward.1} parent=1 // pred_check_branch
      %109 = sbr.rel (0) target = $region57
    $region56: #{cvae_forward.1} parent=1 // pred_region
      %s111 = ssub.s32 16, 16
      %112 = vsyncadd [#allocation12], %s111
      %s114 = sshll.u32 [#allocation13], 4
      %s115 = int_to_ptr.vmem [resolvable:$true] %s114
      %117 = dma.hbm_to_vmem [thread:$0]  %s13, 16, %s115, [#allocation12]
    $region57: #{cvae_forward.1} parent=1 // pred_fallthru
      _
    // Predicated region
    $region58: #{cvae_forward.1} parent=1 // pred_check
      _
    $region59: #{cvae_forward.1} parent=1 // pred_check_branch
      %119 = sbr.rel (0) target = $region61
    $region60: #{cvae_forward.1} parent=1 // pred_region
      %120 = dma.done [#allocation3], 128
    $region61: #{cvae_forward.1} parent=1 // pred_fallthru
      _
    // Predicated region
    $region62: #{cvae_forward.1} parent=1 // pred_check
      _
    $region63: #{cvae_forward.1} parent=1 // pred_check_branch
      %122 = sbr.rel (0) target = $region65
    $region64: #{cvae_forward.1} parent=1 // pred_region
      %123 = dma.done [#allocation6], 8192
    $region65: #{cvae_forward.1} parent=1 // pred_fallthru
      _
    // Predicated region
    $region66: #{cvae_forward.1} parent=1 // pred_check
      _
    $region67: #{cvae_forward.1} parent=1 // pred_check_branch
      %125 = sbr.rel (0) target = $region69
    $region68: #{cvae_forward.1} parent=1 // pred_region
      %126 = dma.done [#allocation6], 2048
    $region69: #{cvae_forward.1} parent=1 // pred_fallthru
      _
    // Predicated region
    $region70: #{cvae_forward.1} parent=1 // pred_check
      _
    $region71: #{cvae_forward.1} parent=1 // pred_check_branch
      %128 = sbr.rel (0) target = $region73
    $region72: #{cvae_forward.1} parent=1 // pred_region
      %129 = dma.done [#allocation9], 8192
    $region73: #{cvae_forward.1} parent=1 // pred_fallthru
      _
    // Predicated region
    $region74: #{cvae_forward.1} parent=1 // pred_check
      _
    $region75: #{cvae_forward.1} parent=1 // pred_check_branch
      %131 = sbr.rel (0) target = $region77
    $region76: #{cvae_forward.1} parent=1 // pred_region
      %132 = dma.done [#allocation9], 64
    $region77: #{cvae_forward.1} parent=1 // pred_fallthru
      _
    // Predicated region
    $region78: #{cvae_forward.1} parent=1 // pred_check
      _
    $region79: #{cvae_forward.1} parent=1 // pred_check_branch
      %134 = sbr.rel (0) target = $region81
    $region80: #{cvae_forward.1} parent=1 // pred_region
      %135 = dma.done [#allocation12], 4096
    $region81: #{cvae_forward.1} parent=1 // pred_fallthru
      _
    // Predicated region
    $region82: #{cvae_forward.1} parent=1 // pred_check
      _
    $region83: #{cvae_forward.1} parent=1 // pred_check_branch
      %137 = sbr.rel (0) target = $region85
    $region84: #{cvae_forward.1} parent=1 // pred_region
      %138 = dma.done [#allocation12], 16
    $region85: #{cvae_forward.1} parent=1 // pred_fallthru
      _
    %v140 = vld [vmem:[%s0] sm:$0xf]
    %v141 = vld [vmem:[%s4] sm:$0xff]
    %v142 = vld [vmem:[%s4 + $0x8] sm:$0xff]
    %v143 = vld [vmem:[%s4 + $0x10] sm:$0xff]
    %v144 = vld [vmem:[%s4 + $0x18] sm:$0xff]
    %v145 = vld [vmem:[%s4 + $0x20] sm:$0xff]
    %v146 = vld [vmem:[%s4 + $0x28] sm:$0xff]
    %v147 = vld [vmem:[%s4 + $0x30] sm:$0xff]
    %v148 = vld [vmem:[%s4 + $0x38] sm:$0xff]
    %v149 = vld [vmem:[%s4 + $0x40] sm:$0xff]
    %v150 = vld [vmem:[%s4 + $0x48] sm:$0xff]
    %v151 = vld [vmem:[%s4 + $0x50] sm:$0xff]
    %v152 = vld [vmem:[%s4 + $0x58] sm:$0xff]
    %v153 = vld [vmem:[%s4 + $0x60] sm:$0xff]
    %v154 = vld [vmem:[%s4 + $0x68] sm:$0xff]
    %v155 = vld [vmem:[%s4 + $0x70] sm:$0xff]
    %v156 = vld [vmem:[%s4 + $0x78] sm:$0xff]
    %v157 = vld [vmem:[%s2] sm:$0xff]
    %v158 = vld [vmem:[%s2 + $0x8] sm:$0xff]
    %v159 = vld [vmem:[%s2 + $0x10] sm:$0xff]
    %v160 = vld [vmem:[%s2 + $0x18] sm:$0xff]
    %v177 = vunpack.c.l.b16 %v141
    %v178 = vunpack.c.h.b16 %v141
    %v179 = vunpack.c.l.b16 %v142
    %v180 = vunpack.c.h.b16 %v142
    %v181 = vunpack.c.l.b16 %v143
    %v182 = vunpack.c.h.b16 %v143
    %v183 = vunpack.c.l.b16 %v144
    %v184 = vunpack.c.h.b16 %v144
    %v185 = vunpack.c.l.b16 %v145
    %v186 = vunpack.c.h.b16 %v145
    %v187 = vunpack.c.l.b16 %v146
    %v188 = vunpack.c.h.b16 %v146
    %v189 = vunpack.c.l.b16 %v147
    %v190 = vunpack.c.h.b16 %v147
    %v191 = vunpack.c.l.b16 %v148
    %v192 = vunpack.c.h.b16 %v148
    %v193 = vunpack.c.l.b16 %v149
    %v194 = vunpack.c.h.b16 %v149
    %v195 = vunpack.c.l.b16 %v150
    %v196 = vunpack.c.h.b16 %v150
    %v197 = vunpack.c.l.b16 %v151
    %v198 = vunpack.c.h.b16 %v151
    %v199 = vunpack.c.l.b16 %v152
    %v200 = vunpack.c.h.b16 %v152
    %v201 = vunpack.c.l.b16 %v153
    %v202 = vunpack.c.h.b16 %v153
    %v203 = vunpack.c.l.b16 %v154
    %v204 = vunpack.c.h.b16 %v154
    %v205 = vunpack.c.l.b16 %v155
    %v206 = vunpack.c.h.b16 %v155
    %v207 = vunpack.c.l.b16 %v156
    %v208 = vunpack.c.h.b16 %v156
    %v209 = vpack.c.b16 %v181, %v177
    %v210 = vpack.c.b16 %v182, %v178
    %v211 = vpack.c.b16 %v183, %v179
    %v212 = vpack.c.b16 %v184, %v180
    %v213 = vpack.c.b16 %v189, %v185
    %v214 = vpack.c.b16 %v190, %v186
    %v215 = vpack.c.b16 %v191, %v187
    %v216 = vpack.c.b16 %v192, %v188
    %v217 = vpack.c.b16 %v197, %v193
    %v218 = vpack.c.b16 %v198, %v194
    %v219 = vpack.c.b16 %v199, %v195
    %v220 = vpack.c.b16 %v200, %v196
    %v221 = vpack.c.b16 %v205, %v201
    %v222 = vpack.c.b16 %v206, %v202
    %v223 = vpack.c.b16 %v207, %v203
    %v224 = vpack.c.b16 %v208, %v204
    %vm241 = vcmask 523264
    %v243 = vsel %vm241, %v140, 0
    %245 = vmatprep.subr.bf16.mxu0 %v210
    %246 = vmatpush1.bf16.msra.mxu0 %v209
    %247 = vmatprep.subr.bf16.mxu0 %v214
    %248 = vmatpush1.bf16.msra.mxu0 %v213
    %249 = vmatprep.subr.bf16.mxu0 %v218
    %250 = vmatpush1.bf16.msra.mxu0 %v217
    %251 = vmatprep.subr.bf16.mxu0 %v222
    %252 = vmatpush1.bf16.msra.mxu0 %v221
    %253 = vmatprep.subr.bf16.mxu0 0
    %254 = vmatpush1.bf16.msra.mxu0 0
    %255 = vmatprep.subr.bf16.mxu0 0
    %256 = vmatpush1.bf16.msra.mxu0 0
    %257 = vmatprep.subr.bf16.mxu0 0
    %258 = vmatpush1.bf16.msra.mxu0 0
    %259 = vmatprep.subr.bf16.mxu0 0
    %260 = vmatpush1.bf16.msra.mxu0 0
    %261 = vmatprep.subr.bf16.mxu0 0
    %262 = vmatpush1.bf16.msra.mxu0 0
    %263 = vmatprep.subr.bf16.mxu0 0
    %264 = vmatpush1.bf16.msra.mxu0 0
    %265 = vmatprep.subr.bf16.mxu0 0
    %266 = vmatpush1.bf16.msra.mxu0 0
    %267 = vmatprep.subr.bf16.mxu0 0
    %268 = vmatpush1.bf16.msra.mxu0 0
    %269 = vmatprep.subr.bf16.mxu0 0
    %270 = vmatpush1.bf16.msra.mxu0 0
    %271 = vmatprep.subr.bf16.mxu0 0
    %272 = vmatpush1.bf16.msra.mxu0 0
    %273 = vmatprep.subr.bf16.mxu0 0
    %274 = vmatpush1.bf16.msra.mxu0 0
    %275 = vmatprep.subr.bf16.mxu0 0
    %276 = vmatpush1.bf16.msra.mxu0 0
    %277 = vmatprep.mubr.bf16.mxu0 0
    %278 = vmatmul.mubr.bf16.gmra.mrb[0].mxu0 %v243
    %v279 = vpop.f32.mrb[0].mxu0
    %v280 = vadd.f32 %v157, %v279
    %v281 = vpop.f32.mrb[0].mxu0
    %v282 = vadd.f32 %v158, %v281
    %v283 = vpop.f32.mrb[0].mxu0
    %v284 = vpop.f32.mrb[0].mxu0
    %285 = vdwg.mxu0
    %286 = vmatprep.subr.bf16.mxu0 %v212
    %287 = vmatpush1.bf16.msra.mxu0 %v211
    %288 = vmatprep.subr.bf16.mxu0 %v216
    %289 = vmatpush1.bf16.msra.mxu0 %v215
    %290 = vmatprep.subr.bf16.mxu0 %v220
    %291 = vmatpush1.bf16.msra.mxu0 %v219
    %292 = vmatprep.subr.bf16.mxu0 %v224
    %293 = vmatpush1.bf16.msra.mxu0 %v223
    %294 = vmatprep.subr.bf16.mxu0 0
    %295 = vmatpush1.bf16.msra.mxu0 0
    %296 = vmatprep.subr.bf16.mxu0 0
    %297 = vmatpush1.bf16.msra.mxu0 0
    %298 = vmatprep.subr.bf16.mxu0 0
    %299 = vmatpush1.bf16.msra.mxu0 0
    %300 = vmatprep.subr.bf16.mxu0 0
    %301 = vmatpush1.bf16.msra.mxu0 0
    %302 = vmatprep.subr.bf16.mxu0 0
    %303 = vmatpush1.bf16.msra.mxu0 0
    %304 = vmatprep.subr.bf16.mxu0 0
    %305 = vmatpush1.bf16.msra.mxu0 0
    %306 = vmatprep.subr.bf16.mxu0 0
    %307 = vmatpush1.bf16.msra.mxu0 0
    %308 = vmatprep.subr.bf16.mxu0 0
    %309 = vmatpush1.bf16.msra.mxu0 0
    %310 = vmatprep.subr.bf16.mxu0 0
    %311 = vmatpush1.bf16.msra.mxu0 0
    %312 = vmatprep.subr.bf16.mxu0 0
    %313 = vmatpush1.bf16.msra.mxu0 0
    %314 = vmatprep.subr.bf16.mxu0 0
    %315 = vmatpush1.bf16.msra.mxu0 0
    %316 = vmatprep.subr.bf16.mxu0 0
    %317 = vmatpush1.bf16.msra.mxu0 0
    %318 = vmatprep.mubr.bf16.mxu0 0
    %319 = vmatmul.mubr.bf16.gmra.mrb[0].mxu0 %v243
    %v320 = vpop.f32.mrb[0].mxu0
    %v321 = vadd.f32 %v159, %v320
    %v322 = vpop.f32.mrb[0].mxu0
    %v323 = vadd.f32 %v160, %v322
    %v324 = vpop.f32.mrb[0].mxu0
    %v325 = vpop.f32.mrb[0].mxu0
    %326 = vdwg.mxu0
    %v327 = vmax.f32 %v280, 0.0
    %v328 = vmax.f32 %v282, 0.0
    %v329 = vmax.f32 %v321, 0.0
    %v330 = vmax.f32 %v323, 0.0
    %v331 = vpack.c.bf16 %v327, %v327
    %v332 = vpack.c.bf16 %v328, %v328
    %v333 = vpack.c.bf16 %v329, %v329
    %v334 = vpack.c.bf16 %v330, %v330
    %v335 = vld [vmem:[#allocation5] sm:$0xff]
    %v336 = vld [vmem:[#allocation5 + $0x8] sm:$0xff]
    %v337 = vld [vmem:[#allocation5 + $0x10] sm:$0xff]
    %v338 = vld [vmem:[#allocation5 + $0x18] sm:$0xff]
    %v339 = vld [vmem:[#allocation5 + $0x20] sm:$0xff]
    %v340 = vld [vmem:[#allocation5 + $0x28] sm:$0xff]
    %v341 = vld [vmem:[#allocation5 + $0x30] sm:$0xff]
    %v342 = vld [vmem:[#allocation5 + $0x38] sm:$0xff]
    %v343 = vld [vmem:[#allocation5 + $0x40] sm:$0xff]
    %v344 = vld [vmem:[#allocation5 + $0x48] sm:$0xff]
    %v345 = vld [vmem:[#allocation5 + $0x50] sm:$0xff]
    %v346 = vld [vmem:[#allocation5 + $0x58] sm:$0xff]
    %v347 = vld [vmem:[#allocation5 + $0x60] sm:$0xff]
    %v348 = vld [vmem:[#allocation5 + $0x68] sm:$0xff]
    %v349 = vld [vmem:[#allocation5 + $0x70] sm:$0xff]
    %v350 = vld [vmem:[#allocation5 + $0x78] sm:$0xff]
    %v351 = vld [vmem:[#allocation5 + $0x80] sm:$0xff]
    %v352 = vld [vmem:[#allocation5 + $0x88] sm:$0xff]
    %v353 = vld [vmem:[#allocation5 + $0x90] sm:$0xff]
    %v354 = vld [vmem:[#allocation5 + $0x98] sm:$0xff]
    %v355 = vld [vmem:[#allocation5 + $0xa0] sm:$0xff]
    %v356 = vld [vmem:[#allocation5 + $0xa8] sm:$0xff]
    %v357 = vld [vmem:[#allocation5 + $0xb0] sm:$0xff]
    %v358 = vld [vmem:[#allocation5 + $0xb8] sm:$0xff]
    %v359 = vld [vmem:[#allocation5 + $0xc0] sm:$0xff]
    %v360 = vld [vmem:[#allocation5 + $0xc8] sm:$0xff]
    %v361 = vld [vmem:[#allocation5 + $0xd0] sm:$0xff]
    %v362 = vld [vmem:[#allocation5 + $0xd8] sm:$0xff]
    %v363 = vld [vmem:[#allocation5 + $0xe0] sm:$0xff]
    %v364 = vld [vmem:[#allocation5 + $0xe8] sm:$0xff]
    %v365 = vld [vmem:[#allocation5 + $0xf0] sm:$0xff]
    %v366 = vld [vmem:[#allocation5 + $0xf8] sm:$0xff]
    %v367 = vld [vmem:[#allocation5 + $0x100] sm:$0xff]
    %v368 = vld [vmem:[#allocation5 + $0x108] sm:$0xff]
    %v369 = vld [vmem:[#allocation5 + $0x110] sm:$0xff]
    %v370 = vld [vmem:[#allocation5 + $0x118] sm:$0xff]
    %v371 = vld [vmem:[#allocation5 + $0x120] sm:$0xff]
    %v372 = vld [vmem:[#allocation5 + $0x128] sm:$0xff]
    %v373 = vld [vmem:[#allocation5 + $0x130] sm:$0xff]
    %v374 = vld [vmem:[#allocation5 + $0x138] sm:$0xff]
    %v375 = vld [vmem:[#allocation5 + $0x140] sm:$0xff]
    %v376 = vld [vmem:[#allocation5 + $0x148] sm:$0xff]
    %v377 = vld [vmem:[#allocation5 + $0x150] sm:$0xff]
    %v378 = vld [vmem:[#allocation5 + $0x158] sm:$0xff]
    %v379 = vld [vmem:[#allocation5 + $0x160] sm:$0xff]
    %v380 = vld [vmem:[#allocation5 + $0x168] sm:$0xff]
    %v381 = vld [vmem:[#allocation5 + $0x170] sm:$0xff]
    %v382 = vld [vmem:[#allocation5 + $0x178] sm:$0xff]
    %v383 = vld [vmem:[#allocation5 + $0x180] sm:$0xff]
    %v384 = vld [vmem:[#allocation5 + $0x188] sm:$0xff]
    %v385 = vld [vmem:[#allocation5 + $0x190] sm:$0xff]
    %v386 = vld [vmem:[#allocation5 + $0x198] sm:$0xff]
    %v387 = vld [vmem:[#allocation5 + $0x1a0] sm:$0xff]
    %v388 = vld [vmem:[#allocation5 + $0x1a8] sm:$0xff]
    %v389 = vld [vmem:[#allocation5 + $0x1b0] sm:$0xff]
    %v390 = vld [vmem:[#allocation5 + $0x1b8] sm:$0xff]
    %v391 = vld [vmem:[#allocation5 + $0x1c0] sm:$0xff]
    %v392 = vld [vmem:[#allocation5 + $0x1c8] sm:$0xff]
    %v393 = vld [vmem:[#allocation5 + $0x1d0] sm:$0xff]
    %v394 = vld [vmem:[#allocation5 + $0x1d8] sm:$0xff]
    %v395 = vld [vmem:[#allocation5 + $0x1e0] sm:$0xff]
    %v396 = vld [vmem:[#allocation5 + $0x1e8] sm:$0xff]
    %v397 = vld [vmem:[#allocation5 + $0x1f0] sm:$0xff]
    %v398 = vld [vmem:[#allocation5 + $0x1f8] sm:$0xff]
    %v399 = vld [vmem:[%s6] sm:$0x3]
    %v401 = vlaneseq
    %v402 = vshrl.u32 %v401, 7
    %v403 = vsub.s32 0, %v402
    %v404 = vrot.slane %v399, %v403
    %v405 = vlaneseq
    %v406 = vshrl.u32 %v405, 7
    %v407 = vsub.s32 1, %v406
    %v408 = vrot.slane %v399, %v407
    %v475 = vunpack.c.l.b16 %v335
    %v476 = vunpack.c.h.b16 %v335
    %v477 = vunpack.c.l.b16 %v336
    %v478 = vunpack.c.h.b16 %v336
    %v479 = vunpack.c.l.b16 %v337
    %v480 = vunpack.c.h.b16 %v337
    %v481 = vunpack.c.l.b16 %v338
    %v482 = vunpack.c.h.b16 %v338
    %v483 = vunpack.c.l.b16 %v339
    %v484 = vunpack.c.h.b16 %v339
    %v485 = vunpack.c.l.b16 %v340
    %v486 = vunpack.c.h.b16 %v340
    %v487 = vunpack.c.l.b16 %v341
    %v488 = vunpack.c.h.b16 %v341
    %v489 = vunpack.c.l.b16 %v342
    %v490 = vunpack.c.h.b16 %v342
    %v491 = vunpack.c.l.b16 %v343
    %v492 = vunpack.c.h.b16 %v343
    %v493 = vunpack.c.l.b16 %v344
    %v494 = vunpack.c.h.b16 %v344
    %v495 = vunpack.c.l.b16 %v345
    %v496 = vunpack.c.h.b16 %v345
    %v497 = vunpack.c.l.b16 %v346
    %v498 = vunpack.c.h.b16 %v346
    %v499 = vunpack.c.l.b16 %v347
    %v500 = vunpack.c.h.b16 %v347
    %v501 = vunpack.c.l.b16 %v348
    %v502 = vunpack.c.h.b16 %v348
    %v503 = vunpack.c.l.b16 %v349
    %v504 = vunpack.c.h.b16 %v349
    %v505 = vunpack.c.l.b16 %v350
    %v506 = vunpack.c.h.b16 %v350
    %v507 = vunpack.c.l.b16 %v351
    %v508 = vunpack.c.h.b16 %v351
    %v509 = vunpack.c.l.b16 %v352
    %v510 = vunpack.c.h.b16 %v352
    %v511 = vunpack.c.l.b16 %v353
    %v512 = vunpack.c.h.b16 %v353
    %v513 = vunpack.c.l.b16 %v354
    %v514 = vunpack.c.h.b16 %v354
    %v515 = vunpack.c.l.b16 %v355
    %v516 = vunpack.c.h.b16 %v355
    %v517 = vunpack.c.l.b16 %v356
    %v518 = vunpack.c.h.b16 %v356
    %v519 = vunpack.c.l.b16 %v357
    %v520 = vunpack.c.h.b16 %v357
    %v521 = vunpack.c.l.b16 %v358
    %v522 = vunpack.c.h.b16 %v358
    %v523 = vunpack.c.l.b16 %v359
    %v524 = vunpack.c.h.b16 %v359
    %v525 = vunpack.c.l.b16 %v360
    %v526 = vunpack.c.h.b16 %v360
    %v527 = vunpack.c.l.b16 %v361
    %v528 = vunpack.c.h.b16 %v361
    %v529 = vunpack.c.l.b16 %v362
    %v530 = vunpack.c.h.b16 %v362
    %v531 = vunpack.c.l.b16 %v363
    %v532 = vunpack.c.h.b16 %v363
    %v533 = vunpack.c.l.b16 %v364
    %v534 = vunpack.c.h.b16 %v364
    %v535 = vunpack.c.l.b16 %v365
    %v536 = vunpack.c.h.b16 %v365
    %v537 = vunpack.c.l.b16 %v366
    %v538 = vunpack.c.h.b16 %v366
    %v539 = vunpack.c.l.b16 %v367
    %v540 = vunpack.c.h.b16 %v367
    %v541 = vunpack.c.l.b16 %v368
    %v542 = vunpack.c.h.b16 %v368
    %v543 = vunpack.c.l.b16 %v369
    %v544 = vunpack.c.h.b16 %v369
    %v545 = vunpack.c.l.b16 %v370
    %v546 = vunpack.c.h.b16 %v370
    %v547 = vunpack.c.l.b16 %v371
    %v548 = vunpack.c.h.b16 %v371
    %v549 = vunpack.c.l.b16 %v372
    %v550 = vunpack.c.h.b16 %v372
    %v551 = vunpack.c.l.b16 %v373
    %v552 = vunpack.c.h.b16 %v373
    %v553 = vunpack.c.l.b16 %v374
    %v554 = vunpack.c.h.b16 %v374
    %v555 = vunpack.c.l.b16 %v375
    %v556 = vunpack.c.h.b16 %v375
    %v557 = vunpack.c.l.b16 %v376
    %v558 = vunpack.c.h.b16 %v376
    %v559 = vunpack.c.l.b16 %v377
    %v560 = vunpack.c.h.b16 %v377
    %v561 = vunpack.c.l.b16 %v378
    %v562 = vunpack.c.h.b16 %v378
    %v563 = vunpack.c.l.b16 %v379
    %v564 = vunpack.c.h.b16 %v379
    %v565 = vunpack.c.l.b16 %v380
    %v566 = vunpack.c.h.b16 %v380
    %v567 = vunpack.c.l.b16 %v381
    %v568 = vunpack.c.h.b16 %v381
    %v569 = vunpack.c.l.b16 %v382
    %v570 = vunpack.c.h.b16 %v382
    %v571 = vunpack.c.l.b16 %v383
    %v572 = vunpack.c.h.b16 %v383
    %v573 = vunpack.c.l.b16 %v384
    %v574 = vunpack.c.h.b16 %v384
    %v575 = vunpack.c.l.b16 %v385
    %v576 = vunpack.c.h.b16 %v385
    %v577 = vunpack.c.l.b16 %v386
    %v578 = vunpack.c.h.b16 %v386
    %v579 = vunpack.c.l.b16 %v387
    %v580 = vunpack.c.h.b16 %v387
    %v581 = vunpack.c.l.b16 %v388
    %v582 = vunpack.c.h.b16 %v388
    %v583 = vunpack.c.l.b16 %v389
    %v584 = vunpack.c.h.b16 %v389
    %v585 = vunpack.c.l.b16 %v390
    %v586 = vunpack.c.h.b16 %v390
    %v587 = vunpack.c.l.b16 %v391
    %v588 = vunpack.c.h.b16 %v391
    %v589 = vunpack.c.l.b16 %v392
    %v590 = vunpack.c.h.b16 %v392
    %v591 = vunpack.c.l.b16 %v393
    %v592 = vunpack.c.h.b16 %v393
    %v593 = vunpack.c.l.b16 %v394
    %v594 = vunpack.c.h.b16 %v394
    %v595 = vunpack.c.l.b16 %v395
    %v596 = vunpack.c.h.b16 %v395
    %v597 = vunpack.c.l.b16 %v396
    %v598 = vunpack.c.h.b16 %v396
    %v599 = vunpack.c.l.b16 %v397
    %v600 = vunpack.c.h.b16 %v397
    %v601 = vunpack.c.l.b16 %v398
    %v602 = vunpack.c.h.b16 %v398
    %v603 = vpack.c.b16 %v477, %v475
    %v604 = vpack.c.b16 %v478, %v476
    %v605 = vpack.c.b16 %v481, %v479
    %v606 = vpack.c.b16 %v482, %v480
    %v607 = vpack.c.b16 %v485, %v483
    %v608 = vpack.c.b16 %v486, %v484
    %v609 = vpack.c.b16 %v489, %v487
    %v610 = vpack.c.b16 %v490, %v488
    %v611 = vpack.c.b16 %v493, %v491
    %v612 = vpack.c.b16 %v494, %v492
    %v613 = vpack.c.b16 %v497, %v495
    %v614 = vpack.c.b16 %v498, %v496
    %v615 = vpack.c.b16 %v501, %v499
    %v616 = vpack.c.b16 %v502, %v500
    %v617 = vpack.c.b16 %v505, %v503
    %v618 = vpack.c.b16 %v506, %v504
    %v619 = vpack.c.b16 %v509, %v507
    %v620 = vpack.c.b16 %v510, %v508
    %v621 = vpack.c.b16 %v513, %v511
    %v622 = vpack.c.b16 %v514, %v512
    %v623 = vpack.c.b16 %v517, %v515
    %v624 = vpack.c.b16 %v518, %v516
    %v625 = vpack.c.b16 %v521, %v519
    %v626 = vpack.c.b16 %v522, %v520
    %v627 = vpack.c.b16 %v525, %v523
    %v628 = vpack.c.b16 %v526, %v524
    %v629 = vpack.c.b16 %v529, %v527
    %v630 = vpack.c.b16 %v530, %v528
    %v631 = vpack.c.b16 %v533, %v531
    %v632 = vpack.c.b16 %v534, %v532
    %v633 = vpack.c.b16 %v537, %v535
    %v634 = vpack.c.b16 %v538, %v536
    %v635 = vpack.c.b16 %v541, %v539
    %v636 = vpack.c.b16 %v542, %v540
    %v637 = vpack.c.b16 %v545, %v543
    %v638 = vpack.c.b16 %v546, %v544
    %v639 = vpack.c.b16 %v549, %v547
    %v640 = vpack.c.b16 %v550, %v548
    %v641 = vpack.c.b16 %v553, %v551
    %v642 = vpack.c.b16 %v554, %v552
    %v643 = vpack.c.b16 %v557, %v555
    %v644 = vpack.c.b16 %v558, %v556
    %v645 = vpack.c.b16 %v561, %v559
    %v646 = vpack.c.b16 %v562, %v560
    %v647 = vpack.c.b16 %v565, %v563
    %v648 = vpack.c.b16 %v566, %v564
    %v649 = vpack.c.b16 %v569, %v567
    %v650 = vpack.c.b16 %v570, %v568
    %v651 = vpack.c.b16 %v573, %v571
    %v652 = vpack.c.b16 %v574, %v572
    %v653 = vpack.c.b16 %v577, %v575
    %v654 = vpack.c.b16 %v578, %v576
    %v655 = vpack.c.b16 %v581, %v579
    %v656 = vpack.c.b16 %v582, %v580
    %v657 = vpack.c.b16 %v585, %v583
    %v658 = vpack.c.b16 %v586, %v584
    %v659 = vpack.c.b16 %v589, %v587
    %v660 = vpack.c.b16 %v590, %v588
    %v661 = vpack.c.b16 %v593, %v591
    %v662 = vpack.c.b16 %v594, %v592
    %v663 = vpack.c.b16 %v597, %v595
    %v664 = vpack.c.b16 %v598, %v596
    %v665 = vpack.c.b16 %v601, %v599
    %v666 = vpack.c.b16 %v602, %v600
    %731 = vmatprep.subr.bf16.mxu0 %v604
    %732 = vmatpush1.bf16.msra.mxu0 %v603
    %733 = vmatprep.subr.bf16.mxu0 %v606
    %734 = vmatpush1.bf16.msra.mxu0 %v605
    %735 = vmatprep.subr.bf16.mxu0 %v608
    %736 = vmatpush1.bf16.msra.mxu0 %v607
    %737 = vmatprep.subr.bf16.mxu0 %v610
    %738 = vmatpush1.bf16.msra.mxu0 %v609
    %739 = vmatprep.subr.bf16.mxu0 %v612
    %740 = vmatpush1.bf16.msra.mxu0 %v611
    %741 = vmatprep.subr.bf16.mxu0 %v614
    %742 = vmatpush1.bf16.msra.mxu0 %v613
    %743 = vmatprep.subr.bf16.mxu0 %v616
    %744 = vmatpush1.bf16.msra.mxu0 %v615
    %745 = vmatprep.subr.bf16.mxu0 %v618
    %746 = vmatpush1.bf16.msra.mxu0 %v617
    %747 = vmatprep.subr.bf16.mxu0 %v620
    %748 = vmatpush1.bf16.msra.mxu0 %v619
    %749 = vmatprep.subr.bf16.mxu0 %v622
    %750 = vmatpush1.bf16.msra.mxu0 %v621
    %751 = vmatprep.subr.bf16.mxu0 %v624
    %752 = vmatpush1.bf16.msra.mxu0 %v623
    %753 = vmatprep.subr.bf16.mxu0 %v626
    %754 = vmatpush1.bf16.msra.mxu0 %v625
    %755 = vmatprep.subr.bf16.mxu0 %v628
    %756 = vmatpush1.bf16.msra.mxu0 %v627
    %757 = vmatprep.subr.bf16.mxu0 %v630
    %758 = vmatpush1.bf16.msra.mxu0 %v629
    %759 = vmatprep.subr.bf16.mxu0 %v632
    %760 = vmatpush1.bf16.msra.mxu0 %v631
    %761 = vmatprep.subr.bf16.mxu0 %v634
    %762 = vmatpush1.bf16.msra.mxu0 %v633
    %763 = vmatprep.mubr.bf16.mxu0 %v332
    %764 = vmatmul.mubr.bf16.gmra.mrb[0].mxu0 %v331
    %v765 = vpop.f32.mrb[0].mxu0
    %v766 = vadd.f32 %v404, %v765
    %v767 = vpop.f32.mrb[0].mxu0
    %v768 = vadd.f32 %v408, %v767
    %v769 = vpop.f32.mrb[0].mxu0
    %v770 = vpop.f32.mrb[0].mxu0
    %771 = vdwg.mxu0
    %772 = vmatprep.subr.bf16.mxu0 %v636
    %773 = vmatpush1.bf16.msra.mxu0 %v635
    %774 = vmatprep.subr.bf16.mxu0 %v638
    %775 = vmatpush1.bf16.msra.mxu0 %v637
    %776 = vmatprep.subr.bf16.mxu0 %v640
    %777 = vmatpush1.bf16.msra.mxu0 %v639
    %778 = vmatprep.subr.bf16.mxu0 %v642
    %779 = vmatpush1.bf16.msra.mxu0 %v641
    %780 = vmatprep.subr.bf16.mxu0 %v644
    %781 = vmatpush1.bf16.msra.mxu0 %v643
    %782 = vmatprep.subr.bf16.mxu0 %v646
    %783 = vmatpush1.bf16.msra.mxu0 %v645
    %784 = vmatprep.subr.bf16.mxu0 %v648
    %785 = vmatpush1.bf16.msra.mxu0 %v647
    %786 = vmatprep.subr.bf16.mxu0 %v650
    %787 = vmatpush1.bf16.msra.mxu0 %v649
    %788 = vmatprep.subr.bf16.mxu0 %v652
    %789 = vmatpush1.bf16.msra.mxu0 %v651
    %790 = vmatprep.subr.bf16.mxu0 %v654
    %791 = vmatpush1.bf16.msra.mxu0 %v653
    %792 = vmatprep.subr.bf16.mxu0 %v656
    %793 = vmatpush1.bf16.msra.mxu0 %v655
    %794 = vmatprep.subr.bf16.mxu0 %v658
    %795 = vmatpush1.bf16.msra.mxu0 %v657
    %796 = vmatprep.subr.bf16.mxu0 %v660
    %797 = vmatpush1.bf16.msra.mxu0 %v659
    %798 = vmatprep.subr.bf16.mxu0 %v662
    %799 = vmatpush1.bf16.msra.mxu0 %v661
    %800 = vmatprep.subr.bf16.mxu0 %v664
    %801 = vmatpush1.bf16.msra.mxu0 %v663
    %802 = vmatprep.subr.bf16.mxu0 %v666
    %803 = vmatpush1.bf16.msra.mxu0 %v665
    %804 = vmatprep.mubr.bf16.mxu0 %v334
    %805 = vmatmul.mubr.bf16.gmra.mrb[0].mxu0 %v333
    %v806 = vpop.f32.mrb[0].mxu0
    %v807 = vadd.f32 %v766, %v806
    %v808 = vpop.f32.mrb[0].mxu0
    %v809 = vadd.f32 %v768, %v808
    %v810 = vpop.f32.mrb[0].mxu0
    %v811 = vpop.f32.mrb[0].mxu0
    %812 = vdwg.mxu0
    %v813 = vmax.f32 %v807, 0.0
    %v814 = vmax.f32 %v809, 0.0
    %v815 = vpack.c.bf16 %v813, %v813
    %v816 = vpack.c.bf16 %v814, %v814
    %v817 = vld [vmem:[#allocation7] sm:$0xf]
    %v818 = vld [vmem:[#allocation7 + $0x4] sm:$0xf]
    %v819 = vld [vmem:[#allocation7 + $0x8] sm:$0xf]
    %v820 = vld [vmem:[#allocation7 + $0xc] sm:$0xf]
    %v821 = vld [vmem:[#allocation7 + $0x10] sm:$0xf]
    %v822 = vld [vmem:[#allocation7 + $0x14] sm:$0xf]
    %v823 = vld [vmem:[#allocation7 + $0x18] sm:$0xf]
    %v824 = vld [vmem:[#allocation7 + $0x1c] sm:$0xf]
    %v825 = vld [vmem:[#allocation7 + $0x20] sm:$0xf]
    %v826 = vld [vmem:[#allocation7 + $0x24] sm:$0xf]
    %v827 = vld [vmem:[#allocation7 + $0x28] sm:$0xf]
    %v828 = vld [vmem:[#allocation7 + $0x2c] sm:$0xf]
    %v829 = vld [vmem:[#allocation7 + $0x30] sm:$0xf]
    %v830 = vld [vmem:[#allocation7 + $0x34] sm:$0xf]
    %v831 = vld [vmem:[#allocation7 + $0x38] sm:$0xf]
    %v832 = vld [vmem:[#allocation7 + $0x3c] sm:$0xf]
    %v833 = vld [vmem:[#allocation7 + $0x40] sm:$0xf]
    %v834 = vld [vmem:[#allocation7 + $0x44] sm:$0xf]
    %v835 = vld [vmem:[#allocation7 + $0x48] sm:$0xf]
    %v836 = vld [vmem:[#allocation7 + $0x4c] sm:$0xf]
    %v837 = vld [vmem:[#allocation7 + $0x50] sm:$0xf]
    %v838 = vld [vmem:[#allocation7 + $0x54] sm:$0xf]
    %v839 = vld [vmem:[#allocation7 + $0x58] sm:$0xf]
    %v840 = vld [vmem:[#allocation7 + $0x5c] sm:$0xf]
    %v841 = vld [vmem:[#allocation7 + $0x60] sm:$0xf]
    %v842 = vld [vmem:[#allocation7 + $0x64] sm:$0xf]
    %v843 = vld [vmem:[#allocation7 + $0x68] sm:$0xf]
    %v844 = vld [vmem:[#allocation7 + $0x6c] sm:$0xf]
    %v845 = vld [vmem:[#allocation7 + $0x70] sm:$0xf]
    %v846 = vld [vmem:[#allocation7 + $0x74] sm:$0xf]
    %v847 = vld [vmem:[#allocation7 + $0x78] sm:$0xf]
    %v848 = vld [vmem:[#allocation7 + $0x7c] sm:$0xf]
    %v849 = vld [vmem:[%s8] sm:$0x1]
    %v851 = vlaneseq
    %v852 = vshrl.u32 %v851, 7
    %v853 = vsub.s32 0, %v852
    %v854 = vrot.slane %v849, %v853
    %v888 = vunpack.c.l.b16 %v817
    %v889 = vunpack.c.l.b16 %v818
    %v890 = vunpack.c.l.b16 %v819
    %v891 = vunpack.c.l.b16 %v820
    %v892 = vunpack.c.l.b16 %v821
    %v893 = vunpack.c.l.b16 %v822
    %v894 = vunpack.c.l.b16 %v823
    %v895 = vunpack.c.l.b16 %v824
    %v896 = vunpack.c.l.b16 %v825
    %v897 = vunpack.c.l.b16 %v826
    %v898 = vunpack.c.l.b16 %v827
    %v899 = vunpack.c.l.b16 %v828
    %v900 = vunpack.c.l.b16 %v829
    %v901 = vunpack.c.l.b16 %v830
    %v902 = vunpack.c.l.b16 %v831
    %v903 = vunpack.c.l.b16 %v832
    %v904 = vunpack.c.l.b16 %v833
    %v905 = vunpack.c.l.b16 %v834
    %v906 = vunpack.c.l.b16 %v835
    %v907 = vunpack.c.l.b16 %v836
    %v908 = vunpack.c.l.b16 %v837
    %v909 = vunpack.c.l.b16 %v838
    %v910 = vunpack.c.l.b16 %v839
    %v911 = vunpack.c.l.b16 %v840
    %v912 = vunpack.c.l.b16 %v841
    %v913 = vunpack.c.l.b16 %v842
    %v914 = vunpack.c.l.b16 %v843
    %v915 = vunpack.c.l.b16 %v844
    %v916 = vunpack.c.l.b16 %v845
    %v917 = vunpack.c.l.b16 %v846
    %v918 = vunpack.c.l.b16 %v847
    %v919 = vunpack.c.l.b16 %v848
    %v920 = vpack.c.b16 %v889, %v888
    %v921 = vpack.c.b16 %v891, %v890
    %v922 = vpack.c.b16 %v893, %v892
    %v923 = vpack.c.b16 %v895, %v894
    %v924 = vpack.c.b16 %v897, %v896
    %v925 = vpack.c.b16 %v899, %v898
    %v926 = vpack.c.b16 %v901, %v900
    %v927 = vpack.c.b16 %v903, %v902
    %v928 = vpack.c.b16 %v905, %v904
    %v929 = vpack.c.b16 %v907, %v906
    %v930 = vpack.c.b16 %v909, %v908
    %v931 = vpack.c.b16 %v911, %v910
    %v932 = vpack.c.b16 %v913, %v912
    %v933 = vpack.c.b16 %v915, %v914
    %v934 = vpack.c.b16 %v917, %v916
    %v935 = vpack.c.b16 %v919, %v918
    %952 = vmatprep.subr.bf16.mxu0 0
    %953 = vmatpush1.bf16.msra.mxu0 %v920
    %954 = vmatprep.subr.bf16.mxu0 0
    %955 = vmatpush1.bf16.msra.mxu0 %v921
    %956 = vmatprep.subr.bf16.mxu0 0
    %957 = vmatpush1.bf16.msra.mxu0 %v922
    %958 = vmatprep.subr.bf16.mxu0 0
    %959 = vmatpush1.bf16.msra.mxu0 %v923
    %960 = vmatprep.subr.bf16.mxu0 0
    %961 = vmatpush1.bf16.msra.mxu0 %v924
    %962 = vmatprep.subr.bf16.mxu0 0
    %963 = vmatpush1.bf16.msra.mxu0 %v925
    %964 = vmatprep.subr.bf16.mxu0 0
    %965 = vmatpush1.bf16.msra.mxu0 %v926
    %966 = vmatprep.subr.bf16.mxu0 0
    %967 = vmatpush1.bf16.msra.mxu0 %v927
    %968 = vmatprep.subr.bf16.mxu0 0
    %969 = vmatpush1.bf16.msra.mxu0 %v928
    %970 = vmatprep.subr.bf16.mxu0 0
    %971 = vmatpush1.bf16.msra.mxu0 %v929
    %972 = vmatprep.subr.bf16.mxu0 0
    %973 = vmatpush1.bf16.msra.mxu0 %v930
    %974 = vmatprep.subr.bf16.mxu0 0
    %975 = vmatpush1.bf16.msra.mxu0 %v931
    %976 = vmatprep.subr.bf16.mxu0 0
    %977 = vmatpush1.bf16.msra.mxu0 %v932
    %978 = vmatprep.subr.bf16.mxu0 0
    %979 = vmatpush1.bf16.msra.mxu0 %v933
    %980 = vmatprep.subr.bf16.mxu0 0
    %981 = vmatpush1.bf16.msra.mxu0 %v934
    %982 = vmatprep.subr.bf16.mxu0 0
    %983 = vmatpush1.bf16.msra.mxu0 %v935
    %984 = vmatprep.mubr.bf16.mxu0 %v816
    %985 = vmatmul.mubr.bf16.gmra.mrb[0].mxu0 %v815
    %v986 = vpop.f32.mrb[0].mxu0
    %v987 = vadd.f32 %v854, %v986
    %v988 = vpop.f32.mrb[0].mxu0
    %v989 = vpop.f32.mrb[0].mxu0
    %v990 = vpop.f32.mrb[0].mxu0
    %991 = vdwg.mxu0
    %992 = vst [vmem:[%s15] sm:$0xff] %v987
    %v993 = vld [vmem:[#allocation2] sm:$0xff]
    %v994 = vmul.f32 %v987, 0.5
    %v995 = vmul.f32 %v994, 1.442695
    %v996 = vpow.pop %v995
    %998 = vrot.lane.b32.xlu0 %v996, 112
    %v999 = vpop.permute.xlu0 %998
    %v1001 = vmul.f32 %v993, %v999
    %v1002 = vadd.f32 %v987, %v1001
    %v1003 = vpack.c.bf16 %v1002, %v1002
    %v1004 = vld [vmem:[%s9] sm:$0xff]
    %v1005 = vld [vmem:[%s9 + $0x8] sm:$0xff]
    %v1006 = vld [vmem:[%s3] sm:$0xff]
    %v1007 = vld [vmem:[%s3 + $0x8] sm:$0xff]
    %v1010 = vunpack.c.l.b16 %v1004
    %v1011 = vunpack.c.h.b16 %v1004
    %v1012 = vunpack.c.l.b16 %v1005
    %v1013 = vunpack.c.h.b16 %v1005
    %v1014 = vpack.c.b16 %v1012, %v1010
    %v1015 = vpack.c.b16 %v1013, %v1011
    %vm1018 = vcmask 130048
    %v1020 = vsel %vm1018, %v1003, 0
    %1022 = vmatprep.subr.bf16.mxu0 %v1015
    %1023 = vmatpush1.bf16.msra.mxu0 %v1014
    %1024 = vmatprep.subr.bf16.mxu0 0
    %1025 = vmatpush1.bf16.msra.mxu0 0
    %1026 = vmatprep.subr.bf16.mxu0 0
    %1027 = vmatpush1.bf16.msra.mxu0 0
    %1028 = vmatprep.subr.bf16.mxu0 0
    %1029 = vmatpush1.bf16.msra.mxu0 0
    %1030 = vmatprep.subr.bf16.mxu0 0
    %1031 = vmatpush1.bf16.msra.mxu0 0
    %1032 = vmatprep.subr.bf16.mxu0 0
    %1033 = vmatpush1.bf16.msra.mxu0 0
    %1034 = vmatprep.subr.bf16.mxu0 0
    %1035 = vmatpush1.bf16.msra.mxu0 0
    %1036 = vmatprep.subr.bf16.mxu0 0
    %1037 = vmatpush1.bf16.msra.mxu0 0
    %1038 = vmatprep.subr.bf16.mxu0 0
    %1039 = vmatpush1.bf16.msra.mxu0 0
    %1040 = vmatprep.subr.bf16.mxu0 0
    %1041 = vmatpush1.bf16.msra.mxu0 0
    %1042 = vmatprep.subr.bf16.mxu0 0
    %1043 = vmatpush1.bf16.msra.mxu0 0
    %1044 = vmatprep.subr.bf16.mxu0 0
    %1045 = vmatpush1.bf16.msra.mxu0 0
    %1046 = vmatprep.subr.bf16.mxu0 0
    %1047 = vmatpush1.bf16.msra.mxu0 0
    %1048 = vmatprep.subr.bf16.mxu0 0
    %1049 = vmatpush1.bf16.msra.mxu0 0
    %1050 = vmatprep.subr.bf16.mxu0 0
    %1051 = vmatpush1.bf16.msra.mxu0 0
    %1052 = vmatprep.subr.bf16.mxu0 0
    %1053 = vmatpush1.bf16.msra.mxu0 0
    %1054 = vmatprep.mubr.bf16.mxu0 0
    %1055 = vmatmul.mubr.bf16.gmra.mrb[0].mxu0 %v1020
    %v1056 = vpop.f32.mrb[0].mxu0
    %v1057 = vadd.f32 %v1006, %v1056
    %v1058 = vpop.f32.mrb[0].mxu0
    %v1059 = vadd.f32 %v1007, %v1058
    %v1060 = vpop.f32.mrb[0].mxu0
    %v1061 = vpop.f32.mrb[0].mxu0
    %1062 = vdwg.mxu0
    %v1063 = vmax.f32 %v1057, 0.0
    %v1064 = vmax.f32 %v1059, 0.0
    %v1065 = vpack.c.bf16 %v1063, %v1063
    %v1066 = vpack.c.bf16 %v1064, %v1064
    %v1067 = vld [vmem:[#allocation8] sm:$0xff]
    %v1068 = vld [vmem:[#allocation8 + $0x8] sm:$0xff]
    %v1069 = vld [vmem:[#allocation8 + $0x10] sm:$0xff]
    %v1070 = vld [vmem:[#allocation8 + $0x18] sm:$0xff]
    %v1071 = vld [vmem:[#allocation8 + $0x20] sm:$0xff]
    %v1072 = vld [vmem:[#allocation8 + $0x28] sm:$0xff]
    %v1073 = vld [vmem:[#allocation8 + $0x30] sm:$0xff]
    %v1074 = vld [vmem:[#allocation8 + $0x38] sm:$0xff]
    %v1075 = vld [vmem:[#allocation8 + $0x40] sm:$0xff]
    %v1076 = vld [vmem:[#allocation8 + $0x48] sm:$0xff]
    %v1077 = vld [vmem:[#allocation8 + $0x50] sm:$0xff]
    %v1078 = vld [vmem:[#allocation8 + $0x58] sm:$0xff]
    %v1079 = vld [vmem:[#allocation8 + $0x60] sm:$0xff]
    %v1080 = vld [vmem:[#allocation8 + $0x68] sm:$0xff]
    %v1081 = vld [vmem:[#allocation8 + $0x70] sm:$0xff]
    %v1082 = vld [vmem:[#allocation8 + $0x78] sm:$0xff]
    %v1083 = vld [vmem:[#allocation8 + $0x80] sm:$0xff]
    %v1084 = vld [vmem:[#allocation8 + $0x88] sm:$0xff]
    %v1085 = vld [vmem:[#allocation8 + $0x90] sm:$0xff]
    %v1086 = vld [vmem:[#allocation8 + $0x98] sm:$0xff]
    %v1087 = vld [vmem:[#allocation8 + $0xa0] sm:$0xff]
    %v1088 = vld [vmem:[#allocation8 + $0xa8] sm:$0xff]
    %v1089 = vld [vmem:[#allocation8 + $0xb0] sm:$0xff]
    %v1090 = vld [vmem:[#allocation8 + $0xb8] sm:$0xff]
    %v1091 = vld [vmem:[#allocation8 + $0xc0] sm:$0xff]
    %v1092 = vld [vmem:[#allocation8 + $0xc8] sm:$0xff]
    %v1093 = vld [vmem:[#allocation8 + $0xd0] sm:$0xff]
    %v1094 = vld [vmem:[#allocation8 + $0xd8] sm:$0xff]
    %v1095 = vld [vmem:[#allocation8 + $0xe0] sm:$0xff]
    %v1096 = vld [vmem:[#allocation8 + $0xe8] sm:$0xff]
    %v1097 = vld [vmem:[#allocation8 + $0xf0] sm:$0xff]
    %v1098 = vld [vmem:[#allocation8 + $0xf8] sm:$0xff]
    %v1099 = vld [vmem:[#allocation8 + $0x100] sm:$0xff]
    %v1100 = vld [vmem:[#allocation8 + $0x108] sm:$0xff]
    %v1101 = vld [vmem:[#allocation8 + $0x110] sm:$0xff]
    %v1102 = vld [vmem:[#allocation8 + $0x118] sm:$0xff]
    %v1103 = vld [vmem:[#allocation8 + $0x120] sm:$0xff]
    %v1104 = vld [vmem:[#allocation8 + $0x128] sm:$0xff]
    %v1105 = vld [vmem:[#allocation8 + $0x130] sm:$0xff]
    %v1106 = vld [vmem:[#allocation8 + $0x138] sm:$0xff]
    %v1107 = vld [vmem:[#allocation8 + $0x140] sm:$0xff]
    %v1108 = vld [vmem:[#allocation8 + $0x148] sm:$0xff]
    %v1109 = vld [vmem:[#allocation8 + $0x150] sm:$0xff]
    %v1110 = vld [vmem:[#allocation8 + $0x158] sm:$0xff]
    %v1111 = vld [vmem:[#allocation8 + $0x160] sm:$0xff]
    %v1112 = vld [vmem:[#allocation8 + $0x168] sm:$0xff]
    %v1113 = vld [vmem:[#allocation8 + $0x170] sm:$0xff]
    %v1114 = vld [vmem:[#allocation8 + $0x178] sm:$0xff]
    %v1115 = vld [vmem:[#allocation8 + $0x180] sm:$0xff]
    %v1116 = vld [vmem:[#allocation8 + $0x188] sm:$0xff]
    %v1117 = vld [vmem:[#allocation8 + $0x190] sm:$0xff]
    %v1118 = vld [vmem:[#allocation8 + $0x198] sm:$0xff]
    %v1119 = vld [vmem:[#allocation8 + $0x1a0] sm:$0xff]
    %v1120 = vld [vmem:[#allocation8 + $0x1a8] sm:$0xff]
    %v1121 = vld [vmem:[#allocation8 + $0x1b0] sm:$0xff]
    %v1122 = vld [vmem:[#allocation8 + $0x1b8] sm:$0xff]
    %v1123 = vld [vmem:[#allocation8 + $0x1c0] sm:$0xff]
    %v1124 = vld [vmem:[#allocation8 + $0x1c8] sm:$0xff]
    %v1125 = vld [vmem:[#allocation8 + $0x1d0] sm:$0xff]
    %v1126 = vld [vmem:[#allocation8 + $0x1d8] sm:$0xff]
    %v1127 = vld [vmem:[#allocation8 + $0x1e0] sm:$0xff]
    %v1128 = vld [vmem:[#allocation8 + $0x1e8] sm:$0xff]
    %v1129 = vld [vmem:[#allocation8 + $0x1f0] sm:$0xff]
    %v1130 = vld [vmem:[#allocation8 + $0x1f8] sm:$0xff]
    %v1131 = vld [vmem:[#allocation10] sm:$0xf]
    %v1133 = vlaneseq
    %v1134 = vshrl.u32 %v1133, 7
    %v1135 = vsub.s32 0, %v1134
    %v1136 = vrot.slane %v1131, %v1135
    %v1137 = vlaneseq
    %v1138 = vshrl.u32 %v1137, 7
    %v1139 = vsub.s32 1, %v1138
    %v1140 = vrot.slane %v1131, %v1139
    %v1141 = vlaneseq
    %v1142 = vshrl.u32 %v1141, 7
    %v1143 = vsub.s32 2, %v1142
    %v1144 = vrot.slane %v1131, %v1143
    %v1145 = vlaneseq
    %v1146 = vshrl.u32 %v1145, 7
    %v1147 = vsub.s32 3, %v1146
    %v1148 = vrot.slane %v1131, %v1147
    %v1217 = vunpack.c.l.b16 %v1067
    %v1218 = vunpack.c.h.b16 %v1067
    %v1219 = vunpack.c.l.b16 %v1068
    %v1220 = vunpack.c.h.b16 %v1068
    %v1221 = vunpack.c.l.b16 %v1069
    %v1222 = vunpack.c.h.b16 %v1069
    %v1223 = vunpack.c.l.b16 %v1070
    %v1224 = vunpack.c.h.b16 %v1070
    %v1225 = vunpack.c.l.b16 %v1071
    %v1226 = vunpack.c.h.b16 %v1071
    %v1227 = vunpack.c.l.b16 %v1072
    %v1228 = vunpack.c.h.b16 %v1072
    %v1229 = vunpack.c.l.b16 %v1073
    %v1230 = vunpack.c.h.b16 %v1073
    %v1231 = vunpack.c.l.b16 %v1074
    %v1232 = vunpack.c.h.b16 %v1074
    %v1233 = vunpack.c.l.b16 %v1075
    %v1234 = vunpack.c.h.b16 %v1075
    %v1235 = vunpack.c.l.b16 %v1076
    %v1236 = vunpack.c.h.b16 %v1076
    %v1237 = vunpack.c.l.b16 %v1077
    %v1238 = vunpack.c.h.b16 %v1077
    %v1239 = vunpack.c.l.b16 %v1078
    %v1240 = vunpack.c.h.b16 %v1078
    %v1241 = vunpack.c.l.b16 %v1079
    %v1242 = vunpack.c.h.b16 %v1079
    %v1243 = vunpack.c.l.b16 %v1080
    %v1244 = vunpack.c.h.b16 %v1080
    %v1245 = vunpack.c.l.b16 %v1081
    %v1246 = vunpack.c.h.b16 %v1081
    %v1247 = vunpack.c.l.b16 %v1082
    %v1248 = vunpack.c.h.b16 %v1082
    %v1249 = vunpack.c.l.b16 %v1083
    %v1250 = vunpack.c.h.b16 %v1083
    %v1251 = vunpack.c.l.b16 %v1084
    %v1252 = vunpack.c.h.b16 %v1084
    %v1253 = vunpack.c.l.b16 %v1085
    %v1254 = vunpack.c.h.b16 %v1085
    %v1255 = vunpack.c.l.b16 %v1086
    %v1256 = vunpack.c.h.b16 %v1086
    %v1257 = vunpack.c.l.b16 %v1087
    %v1258 = vunpack.c.h.b16 %v1087
    %v1259 = vunpack.c.l.b16 %v1088
    %v1260 = vunpack.c.h.b16 %v1088
    %v1261 = vunpack.c.l.b16 %v1089
    %v1262 = vunpack.c.h.b16 %v1089
    %v1263 = vunpack.c.l.b16 %v1090
    %v1264 = vunpack.c.h.b16 %v1090
    %v1265 = vunpack.c.l.b16 %v1091
    %v1266 = vunpack.c.h.b16 %v1091
    %v1267 = vunpack.c.l.b16 %v1092
    %v1268 = vunpack.c.h.b16 %v1092
    %v1269 = vunpack.c.l.b16 %v1093
    %v1270 = vunpack.c.h.b16 %v1093
    %v1271 = vunpack.c.l.b16 %v1094
    %v1272 = vunpack.c.h.b16 %v1094
    %v1273 = vunpack.c.l.b16 %v1095
    %v1274 = vunpack.c.h.b16 %v1095
    %v1275 = vunpack.c.l.b16 %v1096
    %v1276 = vunpack.c.h.b16 %v1096
    %v1277 = vunpack.c.l.b16 %v1097
    %v1278 = vunpack.c.h.b16 %v1097
    %v1279 = vunpack.c.l.b16 %v1098
    %v1280 = vunpack.c.h.b16 %v1098
    %v1281 = vunpack.c.l.b16 %v1099
    %v1282 = vunpack.c.h.b16 %v1099
    %v1283 = vunpack.c.l.b16 %v1100
    %v1284 = vunpack.c.h.b16 %v1100
    %v1285 = vunpack.c.l.b16 %v1101
    %v1286 = vunpack.c.h.b16 %v1101
    %v1287 = vunpack.c.l.b16 %v1102
    %v1288 = vunpack.c.h.b16 %v1102
    %v1289 = vunpack.c.l.b16 %v1103
    %v1290 = vunpack.c.h.b16 %v1103
    %v1291 = vunpack.c.l.b16 %v1104
    %v1292 = vunpack.c.h.b16 %v1104
    %v1293 = vunpack.c.l.b16 %v1105
    %v1294 = vunpack.c.h.b16 %v1105
    %v1295 = vunpack.c.l.b16 %v1106
    %v1296 = vunpack.c.h.b16 %v1106
    %v1297 = vunpack.c.l.b16 %v1107
    %v1298 = vunpack.c.h.b16 %v1107
    %v1299 = vunpack.c.l.b16 %v1108
    %v1300 = vunpack.c.h.b16 %v1108
    %v1301 = vunpack.c.l.b16 %v1109
    %v1302 = vunpack.c.h.b16 %v1109
    %v1303 = vunpack.c.l.b16 %v1110
    %v1304 = vunpack.c.h.b16 %v1110
    %v1305 = vunpack.c.l.b16 %v1111
    %v1306 = vunpack.c.h.b16 %v1111
    %v1307 = vunpack.c.l.b16 %v1112
    %v1308 = vunpack.c.h.b16 %v1112
    %v1309 = vunpack.c.l.b16 %v1113
    %v1310 = vunpack.c.h.b16 %v1113
    %v1311 = vunpack.c.l.b16 %v1114
    %v1312 = vunpack.c.h.b16 %v1114
    %v1313 = vunpack.c.l.b16 %v1115
    %v1314 = vunpack.c.h.b16 %v1115
    %v1315 = vunpack.c.l.b16 %v1116
    %v1316 = vunpack.c.h.b16 %v1116
    %v1317 = vunpack.c.l.b16 %v1117
    %v1318 = vunpack.c.h.b16 %v1117
    %v1319 = vunpack.c.l.b16 %v1118
    %v1320 = vunpack.c.h.b16 %v1118
    %v1321 = vunpack.c.l.b16 %v1119
    %v1322 = vunpack.c.h.b16 %v1119
    %v1323 = vunpack.c.l.b16 %v1120
    %v1324 = vunpack.c.h.b16 %v1120
    %v1325 = vunpack.c.l.b16 %v1121
    %v1326 = vunpack.c.h.b16 %v1121
    %v1327 = vunpack.c.l.b16 %v1122
    %v1328 = vunpack.c.h.b16 %v1122
    %v1329 = vunpack.c.l.b16 %v1123
    %v1330 = vunpack.c.h.b16 %v1123
    %v1331 = vunpack.c.l.b16 %v1124
    %v1332 = vunpack.c.h.b16 %v1124
    %v1333 = vunpack.c.l.b16 %v1125
    %v1334 = vunpack.c.h.b16 %v1125
    %v1335 = vunpack.c.l.b16 %v1126
    %v1336 = vunpack.c.h.b16 %v1126
    %v1337 = vunpack.c.l.b16 %v1127
    %v1338 = vunpack.c.h.b16 %v1127
    %v1339 = vunpack.c.l.b16 %v1128
    %v1340 = vunpack.c.h.b16 %v1128
    %v1341 = vunpack.c.l.b16 %v1129
    %v1342 = vunpack.c.h.b16 %v1129
    %v1343 = vunpack.c.l.b16 %v1130
    %v1344 = vunpack.c.h.b16 %v1130
    %v1345 = vpack.c.b16 %v1221, %v1217
    %v1346 = vpack.c.b16 %v1222, %v1218
    %v1347 = vpack.c.b16 %v1223, %v1219
    %v1348 = vpack.c.b16 %v1224, %v1220
    %v1349 = vpack.c.b16 %v1229, %v1225
    %v1350 = vpack.c.b16 %v1230, %v1226
    %v1351 = vpack.c.b16 %v1231, %v1227
    %v1352 = vpack.c.b16 %v1232, %v1228
    %v1353 = vpack.c.b16 %v1237, %v1233
    %v1354 = vpack.c.b16 %v1238, %v1234
    %v1355 = vpack.c.b16 %v1239, %v1235
    %v1356 = vpack.c.b16 %v1240, %v1236
    %v1357 = vpack.c.b16 %v1245, %v1241
    %v1358 = vpack.c.b16 %v1246, %v1242
    %v1359 = vpack.c.b16 %v1247, %v1243
    %v1360 = vpack.c.b16 %v1248, %v1244
    %v1361 = vpack.c.b16 %v1253, %v1249
    %v1362 = vpack.c.b16 %v1254, %v1250
    %v1363 = vpack.c.b16 %v1255, %v1251
    %v1364 = vpack.c.b16 %v1256, %v1252
    %v1365 = vpack.c.b16 %v1261, %v1257
    %v1366 = vpack.c.b16 %v1262, %v1258
    %v1367 = vpack.c.b16 %v1263, %v1259
    %v1368 = vpack.c.b16 %v1264, %v1260
    %v1369 = vpack.c.b16 %v1269, %v1265
    %v1370 = vpack.c.b16 %v1270, %v1266
    %v1371 = vpack.c.b16 %v1271, %v1267
    %v1372 = vpack.c.b16 %v1272, %v1268
    %v1373 = vpack.c.b16 %v1277, %v1273
    %v1374 = vpack.c.b16 %v1278, %v1274
    %v1375 = vpack.c.b16 %v1279, %v1275
    %v1376 = vpack.c.b16 %v1280, %v1276
    %v1377 = vpack.c.b16 %v1285, %v1281
    %v1378 = vpack.c.b16 %v1286, %v1282
    %v1379 = vpack.c.b16 %v1287, %v1283
    %v1380 = vpack.c.b16 %v1288, %v1284
    %v1381 = vpack.c.b16 %v1293, %v1289
    %v1382 = vpack.c.b16 %v1294, %v1290
    %v1383 = vpack.c.b16 %v1295, %v1291
    %v1384 = vpack.c.b16 %v1296, %v1292
    %v1385 = vpack.c.b16 %v1301, %v1297
    %v1386 = vpack.c.b16 %v1302, %v1298
    %v1387 = vpack.c.b16 %v1303, %v1299
    %v1388 = vpack.c.b16 %v1304, %v1300
    %v1389 = vpack.c.b16 %v1309, %v1305
    %v1390 = vpack.c.b16 %v1310, %v1306
    %v1391 = vpack.c.b16 %v1311, %v1307
    %v1392 = vpack.c.b16 %v1312, %v1308
    %v1393 = vpack.c.b16 %v1317, %v1313
    %v1394 = vpack.c.b16 %v1318, %v1314
    %v1395 = vpack.c.b16 %v1319, %v1315
    %v1396 = vpack.c.b16 %v1320, %v1316
    %v1397 = vpack.c.b16 %v1325, %v1321
    %v1398 = vpack.c.b16 %v1326, %v1322
    %v1399 = vpack.c.b16 %v1327, %v1323
    %v1400 = vpack.c.b16 %v1328, %v1324
    %v1401 = vpack.c.b16 %v1333, %v1329
    %v1402 = vpack.c.b16 %v1334, %v1330
    %v1403 = vpack.c.b16 %v1335, %v1331
    %v1404 = vpack.c.b16 %v1336, %v1332
    %v1405 = vpack.c.b16 %v1341, %v1337
    %v1406 = vpack.c.b16 %v1342, %v1338
    %v1407 = vpack.c.b16 %v1343, %v1339
    %v1408 = vpack.c.b16 %v1344, %v1340
    %1473 = vmatprep.subr.bf16.mxu0 %v1346
    %1474 = vmatpush1.bf16.msra.mxu0 %v1345
    %1475 = vmatprep.subr.bf16.mxu0 %v1350
    %1476 = vmatpush1.bf16.msra.mxu0 %v1349
    %1477 = vmatprep.subr.bf16.mxu0 %v1354
    %1478 = vmatpush1.bf16.msra.mxu0 %v1353
    %1479 = vmatprep.subr.bf16.mxu0 %v1358
    %1480 = vmatpush1.bf16.msra.mxu0 %v1357
    %1481 = vmatprep.subr.bf16.mxu0 %v1362
    %1482 = vmatpush1.bf16.msra.mxu0 %v1361
    %1483 = vmatprep.subr.bf16.mxu0 %v1366
    %1484 = vmatpush1.bf16.msra.mxu0 %v1365
    %1485 = vmatprep.subr.bf16.mxu0 %v1370
    %1486 = vmatpush1.bf16.msra.mxu0 %v1369
    %1487 = vmatprep.subr.bf16.mxu0 %v1374
    %1488 = vmatpush1.bf16.msra.mxu0 %v1373
    %1489 = vmatprep.subr.bf16.mxu0 %v1378
    %1490 = vmatpush1.bf16.msra.mxu0 %v1377
    %1491 = vmatprep.subr.bf16.mxu0 %v1382
    %1492 = vmatpush1.bf16.msra.mxu0 %v1381
    %1493 = vmatprep.subr.bf16.mxu0 %v1386
    %1494 = vmatpush1.bf16.msra.mxu0 %v1385
    %1495 = vmatprep.subr.bf16.mxu0 %v1390
    %1496 = vmatpush1.bf16.msra.mxu0 %v1389
    %1497 = vmatprep.subr.bf16.mxu0 %v1394
    %1498 = vmatpush1.bf16.msra.mxu0 %v1393
    %1499 = vmatprep.subr.bf16.mxu0 %v1398
    %1500 = vmatpush1.bf16.msra.mxu0 %v1397
    %1501 = vmatprep.subr.bf16.mxu0 %v1402
    %1502 = vmatpush1.bf16.msra.mxu0 %v1401
    %1503 = vmatprep.subr.bf16.mxu0 %v1406
    %1504 = vmatpush1.bf16.msra.mxu0 %v1405
    %1505 = vmatprep.mubr.bf16.mxu0 %v1066
    %1506 = vmatmul.mubr.bf16.gmra.mrb[0].mxu0 %v1065
    %v1507 = vpop.f32.mrb[0].mxu0
    %v1508 = vadd.f32 %v1136, %v1507
    %v1509 = vpop.f32.mrb[0].mxu0
    %v1510 = vadd.f32 %v1140, %v1509
    %v1511 = vpop.f32.mrb[0].mxu0
    %v1512 = vpop.f32.mrb[0].mxu0
    %1513 = vdwg.mxu0
    %1514 = vmatprep.subr.bf16.mxu0 %v1348
    %1515 = vmatpush1.bf16.msra.mxu0 %v1347
    %1516 = vmatprep.subr.bf16.mxu0 %v1352
    %1517 = vmatpush1.bf16.msra.mxu0 %v1351
    %1518 = vmatprep.subr.bf16.mxu0 %v1356
    %1519 = vmatpush1.bf16.msra.mxu0 %v1355
    %1520 = vmatprep.subr.bf16.mxu0 %v1360
    %1521 = vmatpush1.bf16.msra.mxu0 %v1359
    %1522 = vmatprep.subr.bf16.mxu0 %v1364
    %1523 = vmatpush1.bf16.msra.mxu0 %v1363
    %1524 = vmatprep.subr.bf16.mxu0 %v1368
    %1525 = vmatpush1.bf16.msra.mxu0 %v1367
    %1526 = vmatprep.subr.bf16.mxu0 %v1372
    %1527 = vmatpush1.bf16.msra.mxu0 %v1371
    %1528 = vmatprep.subr.bf16.mxu0 %v1376
    %1529 = vmatpush1.bf16.msra.mxu0 %v1375
    %1530 = vmatprep.subr.bf16.mxu0 %v1380
    %1531 = vmatpush1.bf16.msra.mxu0 %v1379
    %1532 = vmatprep.subr.bf16.mxu0 %v1384
    %1533 = vmatpush1.bf16.msra.mxu0 %v1383
    %1534 = vmatprep.subr.bf16.mxu0 %v1388
    %1535 = vmatpush1.bf16.msra.mxu0 %v1387
    %1536 = vmatprep.subr.bf16.mxu0 %v1392
    %1537 = vmatpush1.bf16.msra.mxu0 %v1391
    %1538 = vmatprep.subr.bf16.mxu0 %v1396
    %1539 = vmatpush1.bf16.msra.mxu0 %v1395
    %1540 = vmatprep.subr.bf16.mxu0 %v1400
    %1541 = vmatpush1.bf16.msra.mxu0 %v1399
    %1542 = vmatprep.subr.bf16.mxu0 %v1404
    %1543 = vmatpush1.bf16.msra.mxu0 %v1403
    %1544 = vmatprep.subr.bf16.mxu0 %v1408
    %1545 = vmatpush1.bf16.msra.mxu0 %v1407
    %1546 = vmatprep.mubr.bf16.mxu0 %v1066
    %1547 = vmatmul.mubr.bf16.gmra.mrb[0].mxu0 %v1065
    %v1548 = vpop.f32.mrb[0].mxu0
    %v1549 = vadd.f32 %v1144, %v1548
    %v1550 = vpop.f32.mrb[0].mxu0
    %v1551 = vadd.f32 %v1148, %v1550
    %v1552 = vpop.f32.mrb[0].mxu0
    %v1553 = vpop.f32.mrb[0].mxu0
    %1554 = vdwg.mxu0
    %v1555 = vmax.f32 %v1508, 0.0
    %v1556 = vmax.f32 %v1510, 0.0
    %v1557 = vmax.f32 %v1549, 0.0
    %v1558 = vmax.f32 %v1551, 0.0
    %v1559 = vpack.c.bf16 %v1555, %v1555
    %v1560 = vpack.c.bf16 %v1556, %v1556
    %v1561 = vpack.c.bf16 %v1557, %v1557
    %v1562 = vpack.c.bf16 %v1558, %v1558
    %v1563 = vld [vmem:[#allocation11] sm:$0xf]
    %v1564 = vld [vmem:[#allocation11 + $0x4] sm:$0xf]
    %v1565 = vld [vmem:[#allocation11 + $0x8] sm:$0xf]
    %v1566 = vld [vmem:[#allocation11 + $0xc] sm:$0xf]
    %v1567 = vld [vmem:[#allocation11 + $0x10] sm:$0xf]
    %v1568 = vld [vmem:[#allocation11 + $0x14] sm:$0xf]
    %v1569 = vld [vmem:[#allocation11 + $0x18] sm:$0xf]
    %v1570 = vld [vmem:[#allocation11 + $0x1c] sm:$0xf]
    %v1571 = vld [vmem:[#allocation11 + $0x20] sm:$0xf]
    %v1572 = vld [vmem:[#allocation11 + $0x24] sm:$0xf]
    %v1573 = vld [vmem:[#allocation11 + $0x28] sm:$0xf]
    %v1574 = vld [vmem:[#allocation11 + $0x2c] sm:$0xf]
    %v1575 = vld [vmem:[#allocation11 + $0x30] sm:$0xf]
    %v1576 = vld [vmem:[#allocation11 + $0x34] sm:$0xf]
    %v1577 = vld [vmem:[#allocation11 + $0x38] sm:$0xf]
    %v1578 = vld [vmem:[#allocation11 + $0x3c] sm:$0xf]
    %v1579 = vld [vmem:[#allocation11 + $0x40] sm:$0xf]
    %v1580 = vld [vmem:[#allocation11 + $0x44] sm:$0xf]
    %v1581 = vld [vmem:[#allocation11 + $0x48] sm:$0xf]
    %v1582 = vld [vmem:[#allocation11 + $0x4c] sm:$0xf]
    %v1583 = vld [vmem:[#allocation11 + $0x50] sm:$0xf]
    %v1584 = vld [vmem:[#allocation11 + $0x54] sm:$0xf]
    %v1585 = vld [vmem:[#allocation11 + $0x58] sm:$0xf]
    %v1586 = vld [vmem:[#allocation11 + $0x5c] sm:$0xf]
    %v1587 = vld [vmem:[#allocation11 + $0x60] sm:$0xf]
    %v1588 = vld [vmem:[#allocation11 + $0x64] sm:$0xf]
    %v1589 = vld [vmem:[#allocation11 + $0x68] sm:$0xf]
    %v1590 = vld [vmem:[#allocation11 + $0x6c] sm:$0xf]
    %v1591 = vld [vmem:[#allocation11 + $0x70] sm:$0xf]
    %v1592 = vld [vmem:[#allocation11 + $0x74] sm:$0xf]
    %v1593 = vld [vmem:[#allocation11 + $0x78] sm:$0xf]
    %v1594 = vld [vmem:[#allocation11 + $0x7c] sm:$0xf]
    %v1595 = vld [vmem:[#allocation11 + $0x80] sm:$0xf]
    %v1596 = vld [vmem:[#allocation11 + $0x84] sm:$0xf]
    %v1597 = vld [vmem:[#allocation11 + $0x88] sm:$0xf]
    %v1598 = vld [vmem:[#allocation11 + $0x8c] sm:$0xf]
    %v1599 = vld [vmem:[#allocation11 + $0x90] sm:$0xf]
    %v1600 = vld [vmem:[#allocation11 + $0x94] sm:$0xf]
    %v1601 = vld [vmem:[#allocation11 + $0x98] sm:$0xf]
    %v1602 = vld [vmem:[#allocation11 + $0x9c] sm:$0xf]
    %v1603 = vld [vmem:[#allocation11 + $0xa0] sm:$0xf]
    %v1604 = vld [vmem:[#allocation11 + $0xa4] sm:$0xf]
    %v1605 = vld [vmem:[#allocation11 + $0xa8] sm:$0xf]
    %v1606 = vld [vmem:[#allocation11 + $0xac] sm:$0xf]
    %v1607 = vld [vmem:[#allocation11 + $0xb0] sm:$0xf]
    %v1608 = vld [vmem:[#allocation11 + $0xb4] sm:$0xf]
    %v1609 = vld [vmem:[#allocation11 + $0xb8] sm:$0xf]
    %v1610 = vld [vmem:[#allocation11 + $0xbc] sm:$0xf]
    %v1611 = vld [vmem:[#allocation11 + $0xc0] sm:$0xf]
    %v1612 = vld [vmem:[#allocation11 + $0xc4] sm:$0xf]
    %v1613 = vld [vmem:[#allocation11 + $0xc8] sm:$0xf]
    %v1614 = vld [vmem:[#allocation11 + $0xcc] sm:$0xf]
    %v1615 = vld [vmem:[#allocation11 + $0xd0] sm:$0xf]
    %v1616 = vld [vmem:[#allocation11 + $0xd4] sm:$0xf]
    %v1617 = vld [vmem:[#allocation11 + $0xd8] sm:$0xf]
    %v1618 = vld [vmem:[#allocation11 + $0xdc] sm:$0xf]
    %v1619 = vld [vmem:[#allocation11 + $0xe0] sm:$0xf]
    %v1620 = vld [vmem:[#allocation11 + $0xe4] sm:$0xf]
    %v1621 = vld [vmem:[#allocation11 + $0xe8] sm:$0xf]
    %v1622 = vld [vmem:[#allocation11 + $0xec] sm:$0xf]
    %v1623 = vld [vmem:[#allocation11 + $0xf0] sm:$0xf]
    %v1624 = vld [vmem:[#allocation11 + $0xf4] sm:$0xf]
    %v1625 = vld [vmem:[#allocation11 + $0xf8] sm:$0xf]
    %v1626 = vld [vmem:[#allocation11 + $0xfc] sm:$0xf]
    %v1627 = vld [vmem:[#allocation13] sm:$0x1]
    %v1629 = vlaneseq
    %v1630 = vshrl.u32 %v1629, 7
    %v1631 = vsub.s32 0, %v1630
    %v1632 = vrot.slane %v1627, %v1631
    %v1698 = vunpack.c.l.b16 %v1563
    %v1699 = vunpack.c.l.b16 %v1564
    %v1700 = vunpack.c.l.b16 %v1565
    %v1701 = vunpack.c.l.b16 %v1566
    %v1702 = vunpack.c.l.b16 %v1567
    %v1703 = vunpack.c.l.b16 %v1568
    %v1704 = vunpack.c.l.b16 %v1569
    %v1705 = vunpack.c.l.b16 %v1570
    %v1706 = vunpack.c.l.b16 %v1571
    %v1707 = vunpack.c.l.b16 %v1572
    %v1708 = vunpack.c.l.b16 %v1573
    %v1709 = vunpack.c.l.b16 %v1574
    %v1710 = vunpack.c.l.b16 %v1575
    %v1711 = vunpack.c.l.b16 %v1576
    %v1712 = vunpack.c.l.b16 %v1577
    %v1713 = vunpack.c.l.b16 %v1578
    %v1714 = vunpack.c.l.b16 %v1579
    %v1715 = vunpack.c.l.b16 %v1580
    %v1716 = vunpack.c.l.b16 %v1581
    %v1717 = vunpack.c.l.b16 %v1582
    %v1718 = vunpack.c.l.b16 %v1583
    %v1719 = vunpack.c.l.b16 %v1584
    %v1720 = vunpack.c.l.b16 %v1585
    %v1721 = vunpack.c.l.b16 %v1586
    %v1722 = vunpack.c.l.b16 %v1587
    %v1723 = vunpack.c.l.b16 %v1588
    %v1724 = vunpack.c.l.b16 %v1589
    %v1725 = vunpack.c.l.b16 %v1590
    %v1726 = vunpack.c.l.b16 %v1591
    %v1727 = vunpack.c.l.b16 %v1592
    %v1728 = vunpack.c.l.b16 %v1593
    %v1729 = vunpack.c.l.b16 %v1594
    %v1730 = vunpack.c.l.b16 %v1595
    %v1731 = vunpack.c.l.b16 %v1596
    %v1732 = vunpack.c.l.b16 %v1597
    %v1733 = vunpack.c.l.b16 %v1598
    %v1734 = vunpack.c.l.b16 %v1599
    %v1735 = vunpack.c.l.b16 %v1600
    %v1736 = vunpack.c.l.b16 %v1601
    %v1737 = vunpack.c.l.b16 %v1602
    %v1738 = vunpack.c.l.b16 %v1603
    %v1739 = vunpack.c.l.b16 %v1604
    %v1740 = vunpack.c.l.b16 %v1605
    %v1741 = vunpack.c.l.b16 %v1606
    %v1742 = vunpack.c.l.b16 %v1607
    %v1743 = vunpack.c.l.b16 %v1608
    %v1744 = vunpack.c.l.b16 %v1609
    %v1745 = vunpack.c.l.b16 %v1610
    %v1746 = vunpack.c.l.b16 %v1611
    %v1747 = vunpack.c.l.b16 %v1612
    %v1748 = vunpack.c.l.b16 %v1613
    %v1749 = vunpack.c.l.b16 %v1614
    %v1750 = vunpack.c.l.b16 %v1615
    %v1751 = vunpack.c.l.b16 %v1616
    %v1752 = vunpack.c.l.b16 %v1617
    %v1753 = vunpack.c.l.b16 %v1618
    %v1754 = vunpack.c.l.b16 %v1619
    %v1755 = vunpack.c.l.b16 %v1620
    %v1756 = vunpack.c.l.b16 %v1621
    %v1757 = vunpack.c.l.b16 %v1622
    %v1758 = vunpack.c.l.b16 %v1623
    %v1759 = vunpack.c.l.b16 %v1624
    %v1760 = vunpack.c.l.b16 %v1625
    %v1761 = vunpack.c.l.b16 %v1626
    %v1762 = vpack.c.b16 %v1699, %v1698
    %v1763 = vpack.c.b16 %v1701, %v1700
    %v1764 = vpack.c.b16 %v1703, %v1702
    %v1765 = vpack.c.b16 %v1705, %v1704
    %v1766 = vpack.c.b16 %v1707, %v1706
    %v1767 = vpack.c.b16 %v1709, %v1708
    %v1768 = vpack.c.b16 %v1711, %v1710
    %v1769 = vpack.c.b16 %v1713, %v1712
    %v1770 = vpack.c.b16 %v1715, %v1714
    %v1771 = vpack.c.b16 %v1717, %v1716
    %v1772 = vpack.c.b16 %v1719, %v1718
    %v1773 = vpack.c.b16 %v1721, %v1720
    %v1774 = vpack.c.b16 %v1723, %v1722
    %v1775 = vpack.c.b16 %v1725, %v1724
    %v1776 = vpack.c.b16 %v1727, %v1726
    %v1777 = vpack.c.b16 %v1729, %v1728
    %v1778 = vpack.c.b16 %v1731, %v1730
    %v1779 = vpack.c.b16 %v1733, %v1732
    %v1780 = vpack.c.b16 %v1735, %v1734
    %v1781 = vpack.c.b16 %v1737, %v1736
    %v1782 = vpack.c.b16 %v1739, %v1738
    %v1783 = vpack.c.b16 %v1741, %v1740
    %v1784 = vpack.c.b16 %v1743, %v1742
    %v1785 = vpack.c.b16 %v1745, %v1744
    %v1786 = vpack.c.b16 %v1747, %v1746
    %v1787 = vpack.c.b16 %v1749, %v1748
    %v1788 = vpack.c.b16 %v1751, %v1750
    %v1789 = vpack.c.b16 %v1753, %v1752
    %v1790 = vpack.c.b16 %v1755, %v1754
    %v1791 = vpack.c.b16 %v1757, %v1756
    %v1792 = vpack.c.b16 %v1759, %v1758
    %v1793 = vpack.c.b16 %v1761, %v1760
    %1826 = vmatprep.subr.bf16.mxu0 0
    %1827 = vmatpush1.bf16.msra.mxu0 %v1762
    %1828 = vmatprep.subr.bf16.mxu0 0
    %1829 = vmatpush1.bf16.msra.mxu0 %v1763
    %1830 = vmatprep.subr.bf16.mxu0 0
    %1831 = vmatpush1.bf16.msra.mxu0 %v1764
    %1832 = vmatprep.subr.bf16.mxu0 0
    %1833 = vmatpush1.bf16.msra.mxu0 %v1765
    %1834 = vmatprep.subr.bf16.mxu0 0
    %1835 = vmatpush1.bf16.msra.mxu0 %v1766
    %1836 = vmatprep.subr.bf16.mxu0 0
    %1837 = vmatpush1.bf16.msra.mxu0 %v1767
    %1838 = vmatprep.subr.bf16.mxu0 0
    %1839 = vmatpush1.bf16.msra.mxu0 %v1768
    %1840 = vmatprep.subr.bf16.mxu0 0
    %1841 = vmatpush1.bf16.msra.mxu0 %v1769
    %1842 = vmatprep.subr.bf16.mxu0 0
    %1843 = vmatpush1.bf16.msra.mxu0 %v1770
    %1844 = vmatprep.subr.bf16.mxu0 0
    %1845 = vmatpush1.bf16.msra.mxu0 %v1771
    %1846 = vmatprep.subr.bf16.mxu0 0
    %1847 = vmatpush1.bf16.msra.mxu0 %v1772
    %1848 = vmatprep.subr.bf16.mxu0 0
    %1849 = vmatpush1.bf16.msra.mxu0 %v1773
    %1850 = vmatprep.subr.bf16.mxu0 0
    %1851 = vmatpush1.bf16.msra.mxu0 %v1774
    %1852 = vmatprep.subr.bf16.mxu0 0
    %1853 = vmatpush1.bf16.msra.mxu0 %v1775
    %1854 = vmatprep.subr.bf16.mxu0 0
    %1855 = vmatpush1.bf16.msra.mxu0 %v1776
    %1856 = vmatprep.subr.bf16.mxu0 0
    %1857 = vmatpush1.bf16.msra.mxu0 %v1777
    %1858 = vmatprep.mubr.bf16.mxu0 %v1560
    %1859 = vmatmul.mubr.bf16.gmra.mrb[0].mxu0 %v1559
    %v1860 = vpop.f32.mrb[0].mxu0
    %v1861 = vadd.f32 %v1632, %v1860
    %v1862 = vpop.f32.mrb[0].mxu0
    %v1863 = vpop.f32.mrb[0].mxu0
    %v1864 = vpop.f32.mrb[0].mxu0
    %1865 = vdwg.mxu0
    %1866 = vmatprep.subr.bf16.mxu0 0
    %1867 = vmatpush1.bf16.msra.mxu0 %v1778
    %1868 = vmatprep.subr.bf16.mxu0 0
    %1869 = vmatpush1.bf16.msra.mxu0 %v1779
    %1870 = vmatprep.subr.bf16.mxu0 0
    %1871 = vmatpush1.bf16.msra.mxu0 %v1780
    %1872 = vmatprep.subr.bf16.mxu0 0
    %1873 = vmatpush1.bf16.msra.mxu0 %v1781
    %1874 = vmatprep.subr.bf16.mxu0 0
    %1875 = vmatpush1.bf16.msra.mxu0 %v1782
    %1876 = vmatprep.subr.bf16.mxu0 0
    %1877 = vmatpush1.bf16.msra.mxu0 %v1783
    %1878 = vmatprep.subr.bf16.mxu0 0
    %1879 = vmatpush1.bf16.msra.mxu0 %v1784
    %1880 = vmatprep.subr.bf16.mxu0 0
    %1881 = vmatpush1.bf16.msra.mxu0 %v1785
    %1882 = vmatprep.subr.bf16.mxu0 0
    %1883 = vmatpush1.bf16.msra.mxu0 %v1786
    %1884 = vmatprep.subr.bf16.mxu0 0
    %1885 = vmatpush1.bf16.msra.mxu0 %v1787
    %1886 = vmatprep.subr.bf16.mxu0 0
    %1887 = vmatpush1.bf16.msra.mxu0 %v1788
    %1888 = vmatprep.subr.bf16.mxu0 0
    %1889 = vmatpush1.bf16.msra.mxu0 %v1789
    %1890 = vmatprep.subr.bf16.mxu0 0
    %1891 = vmatpush1.bf16.msra.mxu0 %v1790
    %1892 = vmatprep.subr.bf16.mxu0 0
    %1893 = vmatpush1.bf16.msra.mxu0 %v1791
    %1894 = vmatprep.subr.bf16.mxu0 0
    %1895 = vmatpush1.bf16.msra.mxu0 %v1792
    %1896 = vmatprep.subr.bf16.mxu0 0
    %1897 = vmatpush1.bf16.msra.mxu0 %v1793
    %1898 = vmatprep.mubr.bf16.mxu0 %v1562
    %1899 = vmatmul.mubr.bf16.gmra.mrb[0].mxu0 %v1561
    %v1900 = vpop.f32.mrb[0].mxu0
    %v1901 = vadd.f32 %v1861, %v1900
    %v1902 = vpop.f32.mrb[0].mxu0
    %v1903 = vpop.f32.mrb[0].mxu0
    %v1904 = vpop.f32.mrb[0].mxu0
    %1905 = vdwg.mxu0
    %v1906 = vxor.u32 %v1901, 2147483648
    %v1907 = vmul.f32 %v1906, 1.442695
    %v1908 = vpow.pop %v1907
    %v1909 = vadd.f32 %v1908, 1.0
    %v1910 = vrcp.pop %v1909
    %v1911 = vmul.f32 1.0, %v1910
    %1912 = vst [vmem:[#allocation14] sm:$0xff] %v1911
    // Predicated region
    $region86: #{cvae_forward.1} parent=1 // pred_check
      _
    $region87: #{cvae_forward.1} parent=1 // pred_check_branch
      %1914 = sbr.rel (0) target = $region89
    $region88: #{cvae_forward.1} parent=1 // pred_region
      %s1916 = ssub.s32 128, 128
      %1917 = vsyncadd [#allocation4], %s1916
      %s1919 = sshll.u32 [#allocation14], 4
      %s1920 = int_to_ptr.vmem [resolvable:$true] %s1919
      %1922 = dma.vmem_to_hbm [thread:$0]  %s1920, 128, %s14, [#allocation4]
    $region89: #{cvae_forward.1} parent=1 // pred_fallthru
      _
    // Predicated region
    $region90: #{cvae_forward.1} parent=1 // pred_check
      _
    $region91: #{cvae_forward.1} parent=1 // pred_check_branch
      %1924 = sbr.rel (0) target = $region93
    $region92: #{cvae_forward.1} parent=1 // pred_region
      _
    $region93: #{cvae_forward.1} parent=1 // pred_fallthru
      _
    // Predicated region
    $region94: #{cvae_forward.1} parent=1 // pred_check
      _
    $region95: #{cvae_forward.1} parent=1 // pred_check_branch
      %1926 = sbr.rel (0) target = $region97
    $region96: #{cvae_forward.1} parent=1 // pred_region
      %1927 = dma.done [#allocation4], 128
    $region97: #{cvae_forward.1} parent=1 // pred_fallthru
      _
    // Predicated region
    $region98: #{cvae_forward.1} parent=1 // pred_check
      _
    $region99: #{cvae_forward.1} parent=1 // pred_check_branch
      %1929 = sbr.rel (0) target = $region101
    $region100: #{cvae_forward.1} parent=1 // pred_region
      _
    $region101: #{cvae_forward.1} parent=1 // pred_fallthru
      _
    %1930 = vsyncpa [#allocation3], 1
    %1931 = vsyncpa [#allocation6], 1
    %1932 = vsyncpa [#allocation9], 1
    %1933 = vsyncpa [#allocation12], 1
    %1934 = vsyncpa [#allocation4], 1

</llo_original>
